<compile_context>
chip_gen: v7x
topology: tpu7x:2x2x1
jax: 0.10.0
libtpu: 0.0.40
codegen_flags: <defaults>
</compile_context>

<pallas_src>
import functools

import jax
import jax.numpy as jnp
import numpy as np
from jax.experimental import pallas as pl
from jax.experimental.pallas import tpu as pltpu


def _mha_kernel(x_ref, wqkv_ref, wout_ref, o_ref, ctx_ref, *, head_num):
    # x_ref: (Bblk, T, E)    wqkv_ref: (E, 3E)  (cols pre-permuted to [Q|K|V],
    # each E chunk head-major (h, d), Q pre-scaled by sqrt(D))
    # wout_ref: (E, E) pre-transposed    o_ref: (Bblk, T, E)
    # ctx_ref: (Bblk, T, E) f32 VMEM scratch for the concatenated head outputs.
    b_blk, T, E = x_ref.shape
    D = E // head_num
    rows = b_blk * T

    # Fused QKV projection on all Bblk*T rows at once (fills the MXU M dim).
    x2d = x_ref[...].reshape(rows, E)
    qkv = jnp.dot(x2d, wqkv_ref[...], preferred_element_type=jnp.float32)  # (rows, 3E)
    q = qkv[:, 0 * E:1 * E].reshape(b_blk, T, E)   # already scaled by sqrt(D)
    k = qkv[:, 1 * E:2 * E].reshape(b_blk, T, E)
    v = qkv[:, 2 * E:3 * E].reshape(b_blk, T, E)

    for h in range(head_num):  # static unrolled loop over heads
        sl = slice(h * D, (h + 1) * D)
        qh = q[:, :, sl]   # (Bblk, T, D)
        kh = k[:, :, sl]
        vh = v[:, :, sl]
        # Batched QK^T contracting the last dims — no explicit K transpose.
        energy = jnp.einsum('bid,bjd->bij', qh, kh,
                            preferred_element_type=jnp.float32)  # (Bblk, T, T)
        m = jnp.max(energy, axis=-1, keepdims=True)
        p = jnp.exp(energy - m)
        s = jnp.sum(p, axis=-1, keepdims=True)
        # Exact reciprocal of the small (Bblk, T, 1) row-sum, then a broadcast
        # multiply over the (Bblk, T, T) tile (cheaper than a full-tile divide,
        # and exact — the approx EUP reciprocal was not accurate enough).
        inv = 1.0 / s
        attn = p * inv
        # 'b h t d -> b t (h d)': scatter this head's PV result into its
        # column slice of the scratch instead of list-append + concatenate.
        ctx_ref[:, :, sl] = jnp.einsum('bij,bjd->bid', attn, vh,
                                       preferred_element_type=jnp.float32)

    ctx = ctx_ref[...].reshape(rows, E)
    out = jnp.dot(ctx, wout_ref[...], preferred_element_type=jnp.float32)
    o_ref[...] = out.reshape(b_blk, T, E).astype(o_ref.dtype)


def _choose_batch_block(B, T, target_rows=256):
    """Largest divisor of B such that b_blk * T <= max(target_rows, T)."""
    best = 1
    cap = max(target_rows, T)
    for cand in range(1, B + 1):
        if B % cand == 0 and cand * T <= cap:
            best = cand
    return best


def multi_head_attention(x, w_qkv, w_out, head_num):
    """x: (B, T, E); w_qkv: (3E, E); w_out: (E, E).  PyTorch W[out, in]."""
    B, T, E = x.shape
    H = head_num
    D = E // H
    scale = float(D) ** 0.5   # torch reference multiplies (not divides) by sqrt(D)

    # The torch rearrange 'b t (d k h) -> k b h t d' interprets the 3E output
    # axis of the fused QKV linear as (d, k, h).  Permute the weight rows once
    # so the QKV output is [Q | K | V] with each E-wide chunk head-major (h, d).
    idx = np.empty(3 * E, dtype=np.int32)
    for kk in range(3):
        for h in range(H):
            for dd in range(D):
                idx[kk * E + h * D + dd] = dd * 3 * H + kk * H + h

    # One-time wrapper-side prep: permute rows, transpose, fold scale into Q.
    w_qkv_t = jnp.transpose(w_qkv[idx])            # (E, 3E)
    w_qkv_t = w_qkv_t.at[:, :E].multiply(scale)    # bake sqrt(D) into Q columns
    w_out_t = jnp.transpose(w_out)                 # (E, E)

    b_blk = _choose_batch_block(B, T)
    grid = (B // b_blk,)

    kernel = functools.partial(_mha_kernel, head_num=H)
    return pl.pallas_call(
        kernel,
        out_shape=jax.ShapeDtypeStruct((B, T, E), x.dtype),
        grid_spec=pltpu.PrefetchScalarGridSpec(
            num_scalar_prefetch=0,
            grid=grid,
            in_specs=[
                pl.BlockSpec((b_blk, T, E), lambda b: (b, 0, 0)),   # x batch block
                pl.BlockSpec((E, 3 * E), lambda b: (0, 0)),         # w_qkv_t (constant)
                pl.BlockSpec((E, E), lambda b: (0, 0)),             # w_out_t (constant)
            ],
            out_specs=pl.BlockSpec((b_blk, T, E), lambda b: (b, 0, 0)),
            scratch_shapes=[pltpu.VMEM((b_blk, T, E), jnp.float32)],
        ),
        compiler_params=pltpu.CompilerParams(
            dimension_semantics=("parallel",)),
    )(x, w_qkv_t, w_out_t)


def reference_mha(x, w_qkv, w_out, head_num):
    """Pure-JAX transcription of the torch forward (mask=None)."""
    B, T, E = x.shape
    H = head_num
    D = E // H
    qkv = jnp.einsum('bte,fe->btf', x, w_qkv)                # nn.Linear: x @ W.T
    qkv = qkv.reshape(B, T, D, 3, H)                         # (d k h) split
    qkv = jnp.transpose(qkv, (3, 0, 4, 1, 2))                # -> (k, b, h, t, d)
    q, k, v = qkv[0], qkv[1], qkv[2]
    energy = jnp.einsum('bhid,bhjd->bhij', q, k) * (float(D) ** 0.5)
    attn = jax.nn.softmax(energy, axis=-1)
    ctx = jnp.einsum('bhij,bhjd->bhid', attn, v)
    ctx = jnp.transpose(ctx, (0, 2, 1, 3)).reshape(B, T, E)  # 'b h t d -> b t (h d)'
    return jnp.einsum('bte,fe->btf', ctx, w_out)


if __name__ == "__main__":
    B, T, E, H = 2, 8, 32, 4

    key = jax.random.PRNGKey(0)
    kx, kq, ko = jax.random.split(key, 3)

    x = jax.random.normal(kx, (B, T, E), dtype=jnp.float32)
    bound = 1.0 / np.sqrt(E)   # PyTorch nn.Linear default init range
    w_qkv = jax.random.uniform(kq, (3 * E, E), minval=-bound, maxval=bound,
                               dtype=jnp.float32)
    w_out = jax.random.uniform(ko, (E, E), minval=-bound, maxval=bound,
                               dtype=jnp.float32)

    out = multi_head_attention(x, w_qkv, w_out, H)
    out = jax.block_until_ready(out)

    ref = jax.block_until_ready(reference_mha(x, w_qkv, w_out, H))
    assert out.shape == (B, T, E)
    # Exact softmax normalization now — f32 end to end, tight tolerance.
    np.testing.assert_allclose(np.asarray(out), np.asarray(ref),
                               rtol=5e-4, atol=1e-4)
    print("KERNEL_OK")
</pallas_src>

<mosaic_0001>
module attributes {stable_mosaic.version = 11 : i64} {
  func.func @_mha_kernel(%arg0: i32, %arg1: memref<2x8x32xf32, #tpu.memory_space<vmem>>, %arg2: memref<32x96xf32, #tpu.memory_space<vmem>>, %arg3: memref<32x32xf32, #tpu.memory_space<vmem>>, %arg4: memref<2x8x32xf32, #tpu.memory_space<vmem>>, %arg5: memref<2x8x32xf32, #tpu.memory_space<vmem>>) attributes {dimension_semantics = [#tpu.dimension_semantics<parallel>], iteration_bounds = array<i64: 1>, scalar_prefetch = 0 : i64, scratch_operands = 1 : i64, tpu.core_type = #tpu.core_type<tc>, window_params = [{transform_indices = @transform_0, window_bounds = array<i64: 2, 8, 32>}, {pipeline_mode = #tpu.pipeline_mode<synchronous>, transform_indices = @transform_1, window_bounds = array<i64: 32, 96>}, {pipeline_mode = #tpu.pipeline_mode<synchronous>, transform_indices = @transform_2, window_bounds = array<i64: 32, 32>}, {transform_indices = @transform_3, window_bounds = array<i64: 2, 8, 32>}]} {
    %c0 = arith.constant 0 : index
    %c0_0 = arith.constant 0 : index
    %c0_1 = arith.constant 0 : index
    %0 = vector.load %arg1[%c0, %c0_0, %c0_1] : memref<2x8x32xf32, #tpu.memory_space<vmem>>, vector<2x8x32xf32>
    %1 = vector.shape_cast %0 : vector<2x8x32xf32> to vector<16x32xf32>
    %c0_2 = arith.constant 0 : index
    %c0_3 = arith.constant 0 : index
    %2 = vector.load %arg2[%c0_2, %c0_3] : memref<32x96xf32, #tpu.memory_space<vmem>>, vector<32x96xf32>
    %cst = arith.constant dense<0.000000e+00> : vector<16x96xf32>
    %3 = tpu.matmul %1, %2, %cst {dimension_numbers = #tpu.dot_dimension_numbers<[1], [0], [0], [1], [0, 0, 1, 1], [], []>} : vector<16x32xf32>, vector<32x96xf32>, vector<16x96xf32> -> vector<16x96xf32>
    %4 = vector.extract_strided_slice %3 {offsets = [0, 0], sizes = [16, 32], strides = [1, 1]} : vector<16x96xf32> to vector<16x32xf32>
    %5 = vector.shape_cast %4 : vector<16x32xf32> to vector<2x8x32xf32>
    %6 = vector.extract_strided_slice %3 {offsets = [0, 32], sizes = [16, 32], strides = [1, 1]} : vector<16x96xf32> to vector<16x32xf32>
    %7 = vector.shape_cast %6 : vector<16x32xf32> to vector<2x8x32xf32>
    %8 = vector.extract_strided_slice %3 {offsets = [0, 64], sizes = [16, 32], strides = [1, 1]} : vector<16x96xf32> to vector<16x32xf32>
    %9 = vector.shape_cast %8 : vector<16x32xf32> to vector<2x8x32xf32>
    %10 = vector.extract_strided_slice %5 {offsets = [0, 0, 0], sizes = [2, 8, 8], strides = [1, 1, 1]} : vector<2x8x32xf32> to vector<2x8x8xf32>
    %11 = vector.extract_strided_slice %7 {offsets = [0, 0, 0], sizes = [2, 8, 8], strides = [1, 1, 1]} : vector<2x8x32xf32> to vector<2x8x8xf32>
    %12 = vector.extract_strided_slice %9 {offsets = [0, 0, 0], sizes = [2, 8, 8], strides = [1, 1, 1]} : vector<2x8x32xf32> to vector<2x8x8xf32>
    "tpu.trace_start"() <{level = 10 : i32, message = "bid,bjd->bij"}> : () -> ()
    %cst_4 = arith.constant dense<0.000000e+00> : vector<2x8x8xf32>
    %13 = tpu.matmul %10, %11, %cst_4 {dimension_numbers = #tpu.dot_dimension_numbers<[2], [2], [1], [1], [0, 0, 0, 1, 1, 1], [0], [0]>} : vector<2x8x8xf32>, vector<2x8x8xf32>, vector<2x8x8xf32> -> vector<2x8x8xf32>
    "tpu.trace_stop"() : () -> ()
    %cst_5 = arith.constant dense<0xFF800000> : vector<2x8xf32>
    %14 = vector.multi_reduction <maximumf>, %13, %cst_5 [2] : vector<2x8x8xf32> to vector<2x8xf32>
    %15 = vector.shape_cast %14 : vector<2x8xf32> to vector<2x8x1xf32>
    %16 = vector.broadcast %15 : vector<2x8x1xf32> to vector<2x8x8xf32>
    %17 = arith.subf %13, %16 : vector<2x8x8xf32>
    %18 = math.exp %17 : vector<2x8x8xf32>
    %cst_6 = arith.constant dense<0.000000e+00> : vector<2x8xf32>
    %19 = vector.multi_reduction <add>, %18, %cst_6 [2] : vector<2x8x8xf32> to vector<2x8xf32>
    %20 = vector.shape_cast %19 : vector<2x8xf32> to vector<2x8x1xf32>
    %cst_7 = arith.constant 1.000000e+00 : f32
    %21 = vector.broadcast %cst_7 : f32 to vector<2x8x1xf32>
    %22 = arith.divf %21, %20 : vector<2x8x1xf32>
    %23 = vector.broadcast %22 : vector<2x8x1xf32> to vector<2x8x8xf32>
    %24 = arith.mulf %18, %23 : vector<2x8x8xf32>
    "tpu.trace_start"() <{level = 10 : i32, message = "bij,bjd->bid"}> : () -> ()
    %cst_8 = arith.constant dense<0.000000e+00> : vector<2x8x8xf32>
    %25 = tpu.matmul %24, %12, %cst_8 {dimension_numbers = #tpu.dot_dimension_numbers<[2], [1], [1], [2], [0, 0, 0, 1, 1, 2], [0], [0]>} : vector<2x8x8xf32>, vector<2x8x8xf32>, vector<2x8x8xf32> -> vector<2x8x8xf32>
    "tpu.trace_stop"() : () -> ()
    %c0_9 = arith.constant 0 : index
    %c0_10 = arith.constant 0 : index
    %c0_11 = arith.constant 0 : index
    %26 = vector.load %arg5[%c0_9, %c0_10, %c0_11] : memref<2x8x32xf32, #tpu.memory_space<vmem>>, vector<2x8x8xf32>
    tpu.vector_store %arg5[%c0_9, %c0_10, %c0_11], %25 {strides = array<i32>} : memref<2x8x32xf32, #tpu.memory_space<vmem>>, vector<2x8x8xf32>,
    %27 = vector.extract_strided_slice %5 {offsets = [0, 0, 8], sizes = [2, 8, 8], strides = [1, 1, 1]} : vector<2x8x32xf32> to vector<2x8x8xf32>
    %28 = vector.extract_strided_slice %7 {offsets = [0, 0, 8], sizes = [2, 8, 8], strides = [1, 1, 1]} : vector<2x8x32xf32> to vector<2x8x8xf32>
    %29 = vector.extract_strided_slice %9 {offsets = [0, 0, 8], sizes = [2, 8, 8], strides = [1, 1, 1]} : vector<2x8x32xf32> to vector<2x8x8xf32>
    "tpu.trace_start"() <{level = 10 : i32, message = "bid,bjd->bij"}> : () -> ()
    %cst_12 = arith.constant dense<0.000000e+00> : vector<2x8x8xf32>
    %30 = tpu.matmul %27, %28, %cst_12 {dimension_numbers = #tpu.dot_dimension_numbers<[2], [2], [1], [1], [0, 0, 0, 1, 1, 1], [0], [0]>} : vector<2x8x8xf32>, vector<2x8x8xf32>, vector<2x8x8xf32> -> vector<2x8x8xf32>
    "tpu.trace_stop"() : () -> ()
    %cst_13 = arith.constant dense<0xFF800000> : vector<2x8xf32>
    %31 = vector.multi_reduction <maximumf>, %30, %cst_13 [2] : vector<2x8x8xf32> to vector<2x8xf32>
    %32 = vector.shape_cast %31 : vector<2x8xf32> to vector<2x8x1xf32>
    %33 = vector.broadcast %32 : vector<2x8x1xf32> to vector<2x8x8xf32>
    %34 = arith.subf %30, %33 : vector<2x8x8xf32>
    %35 = math.exp %34 : vector<2x8x8xf32>
    %cst_14 = arith.constant dense<0.000000e+00> : vector<2x8xf32>
    %36 = vector.multi_reduction <add>, %35, %cst_14 [2] : vector<2x8x8xf32> to vector<2x8xf32>
    %37 = vector.shape_cast %36 : vector<2x8xf32> to vector<2x8x1xf32>
    %cst_15 = arith.constant 1.000000e+00 : f32
    %38 = vector.broadcast %cst_15 : f32 to vector<2x8x1xf32>
    %39 = arith.divf %38, %37 : vector<2x8x1xf32>
    %40 = vector.broadcast %39 : vector<2x8x1xf32> to vector<2x8x8xf32>
    %41 = arith.mulf %35, %40 : vector<2x8x8xf32>
    "tpu.trace_start"() <{level = 10 : i32, message = "bij,bjd->bid"}> : () -> ()
    %cst_16 = arith.constant dense<0.000000e+00> : vector<2x8x8xf32>
    %42 = tpu.matmul %41, %29, %cst_16 {dimension_numbers = #tpu.dot_dimension_numbers<[2], [1], [1], [2], [0, 0, 0, 1, 1, 2], [0], [0]>} : vector<2x8x8xf32>, vector<2x8x8xf32>, vector<2x8x8xf32> -> vector<2x8x8xf32>
    "tpu.trace_stop"() : () -> ()
    %c0_17 = arith.constant 0 : index
    %c0_18 = arith.constant 0 : index
    %c8 = arith.constant 8 : index
    %43 = vector.load %arg5[%c0_17, %c0_18, %c8] : memref<2x8x32xf32, #tpu.memory_space<vmem>>, vector<2x8x8xf32>
    tpu.vector_store %arg5[%c0_17, %c0_18, %c8], %42 {strides = array<i32>} : memref<2x8x32xf32, #tpu.memory_space<vmem>>, vector<2x8x8xf32>,
    %44 = vector.extract_strided_slice %5 {offsets = [0, 0, 16], sizes = [2, 8, 8], strides = [1, 1, 1]} : vector<2x8x32xf32> to vector<2x8x8xf32>
    %45 = vector.extract_strided_slice %7 {offsets = [0, 0, 16], sizes = [2, 8, 8], strides = [1, 1, 1]} : vector<2x8x32xf32> to vector<2x8x8xf32>
    %46 = vector.extract_strided_slice %9 {offsets = [0, 0, 16], sizes = [2, 8, 8], strides = [1, 1, 1]} : vector<2x8x32xf32> to vector<2x8x8xf32>
    "tpu.trace_start"() <{level = 10 : i32, message = "bid,bjd->bij"}> : () -> ()
    %cst_19 = arith.constant dense<0.000000e+00> : vector<2x8x8xf32>
    %47 = tpu.matmul %44, %45, %cst_19 {dimension_numbers = #tpu.dot_dimension_numbers<[2], [2], [1], [1], [0, 0, 0, 1, 1, 1], [0], [0]>} : vector<2x8x8xf32>, vector<2x8x8xf32>, vector<2x8x8xf32> -> vector<2x8x8xf32>
    "tpu.trace_stop"() : () -> ()
    %cst_20 = arith.constant dense<0xFF800000> : vector<2x8xf32>
    %48 = vector.multi_reduction <maximumf>, %47, %cst_20 [2] : vector<2x8x8xf32> to vector<2x8xf32>
    %49 = vector.shape_cast %48 : vector<2x8xf32> to vector<2x8x1xf32>
    %50 = vector.broadcast %49 : vector<2x8x1xf32> to vector<2x8x8xf32>
    %51 = arith.subf %47, %50 : vector<2x8x8xf32>
    %52 = math.exp %51 : vector<2x8x8xf32>
    %cst_21 = arith.constant dense<0.000000e+00> : vector<2x8xf32>
    %53 = vector.multi_reduction <add>, %52, %cst_21 [2] : vector<2x8x8xf32> to vector<2x8xf32>
    %54 = vector.shape_cast %53 : vector<2x8xf32> to vector<2x8x1xf32>
    %cst_22 = arith.constant 1.000000e+00 : f32
    %55 = vector.broadcast %cst_22 : f32 to vector<2x8x1xf32>
    %56 = arith.divf %55, %54 : vector<2x8x1xf32>
    %57 = vector.broadcast %56 : vector<2x8x1xf32> to vector<2x8x8xf32>
    %58 = arith.mulf %52, %57 : vector<2x8x8xf32>
    "tpu.trace_start"() <{level = 10 : i32, message = "bij,bjd->bid"}> : () -> ()
    %cst_23 = arith.constant dense<0.000000e+00> : vector<2x8x8xf32>
    %59 = tpu.matmul %58, %46, %cst_23 {dimension_numbers = #tpu.dot_dimension_numbers<[2], [1], [1], [2], [0, 0, 0, 1, 1, 2], [0], [0]>} : vector<2x8x8xf32>, vector<2x8x8xf32>, vector<2x8x8xf32> -> vector<2x8x8xf32>
    "tpu.trace_stop"() : () -> ()
    %c0_24 = arith.constant 0 : index
    %c0_25 = arith.constant 0 : index
    %c16 = arith.constant 16 : index
    %60 = vector.load %arg5[%c0_24, %c0_25, %c16] : memref<2x8x32xf32, #tpu.memory_space<vmem>>, vector<2x8x8xf32>
    tpu.vector_store %arg5[%c0_24, %c0_25, %c16], %59 {strides = array<i32>} : memref<2x8x32xf32, #tpu.memory_space<vmem>>, vector<2x8x8xf32>,
    %61 = vector.extract_strided_slice %5 {offsets = [0, 0, 24], sizes = [2, 8, 8], strides = [1, 1, 1]} : vector<2x8x32xf32> to vector<2x8x8xf32>
    %62 = vector.extract_strided_slice %7 {offsets = [0, 0, 24], sizes = [2, 8, 8], strides = [1, 1, 1]} : vector<2x8x32xf32> to vector<2x8x8xf32>
    %63 = vector.extract_strided_slice %9 {offsets = [0, 0, 24], sizes = [2, 8, 8], strides = [1, 1, 1]} : vector<2x8x32xf32> to vector<2x8x8xf32>
    "tpu.trace_start"() <{level = 10 : i32, message = "bid,bjd->bij"}> : () -> ()
    %cst_26 = arith.constant dense<0.000000e+00> : vector<2x8x8xf32>
    %64 = tpu.matmul %61, %62, %cst_26 {dimension_numbers = #tpu.dot_dimension_numbers<[2], [2], [1], [1], [0, 0, 0, 1, 1, 1], [0], [0]>} : vector<2x8x8xf32>, vector<2x8x8xf32>, vector<2x8x8xf32> -> vector<2x8x8xf32>
    "tpu.trace_stop"() : () -> ()
    %cst_27 = arith.constant dense<0xFF800000> : vector<2x8xf32>
    %65 = vector.multi_reduction <maximumf>, %64, %cst_27 [2] : vector<2x8x8xf32> to vector<2x8xf32>
    %66 = vector.shape_cast %65 : vector<2x8xf32> to vector<2x8x1xf32>
    %67 = vector.broadcast %66 : vector<2x8x1xf32> to vector<2x8x8xf32>
    %68 = arith.subf %64, %67 : vector<2x8x8xf32>
    %69 = math.exp %68 : vector<2x8x8xf32>
    %cst_28 = arith.constant dense<0.000000e+00> : vector<2x8xf32>
    %70 = vector.multi_reduction <add>, %69, %cst_28 [2] : vector<2x8x8xf32> to vector<2x8xf32>
    %71 = vector.shape_cast %70 : vector<2x8xf32> to vector<2x8x1xf32>
    %cst_29 = arith.constant 1.000000e+00 : f32
    %72 = vector.broadcast %cst_29 : f32 to vector<2x8x1xf32>
    %73 = arith.divf %72, %71 : vector<2x8x1xf32>
    %74 = vector.broadcast %73 : vector<2x8x1xf32> to vector<2x8x8xf32>
    %75 = arith.mulf %69, %74 : vector<2x8x8xf32>
    "tpu.trace_start"() <{level = 10 : i32, message = "bij,bjd->bid"}> : () -> ()
    %cst_30 = arith.constant dense<0.000000e+00> : vector<2x8x8xf32>
    %76 = tpu.matmul %75, %63, %cst_30 {dimension_numbers = #tpu.dot_dimension_numbers<[2], [1], [1], [2], [0, 0, 0, 1, 1, 2], [0], [0]>} : vector<2x8x8xf32>, vector<2x8x8xf32>, vector<2x8x8xf32> -> vector<2x8x8xf32>
    "tpu.trace_stop"() : () -> ()
    %c0_31 = arith.constant 0 : index
    %c0_32 = arith.constant 0 : index
    %c24 = arith.constant 24 : index
    %77 = vector.load %arg5[%c0_31, %c0_32, %c24] : memref<2x8x32xf32, #tpu.memory_space<vmem>>, vector<2x8x8xf32>
    tpu.vector_store %arg5[%c0_31, %c0_32, %c24], %76 {strides = array<i32>} : memref<2x8x32xf32, #tpu.memory_space<vmem>>, vector<2x8x8xf32>,
    %c0_33 = arith.constant 0 : index
    %c0_34 = arith.constant 0 : index
    %c0_35 = arith.constant 0 : index
    %78 = vector.load %arg5[%c0_33, %c0_34, %c0_35] : memref<2x8x32xf32, #tpu.memory_space<vmem>>, vector<2x8x32xf32>
    %79 = vector.shape_cast %78 : vector<2x8x32xf32> to vector<16x32xf32>
    %c0_36 = arith.constant 0 : index
    %c0_37 = arith.constant 0 : index
    %80 = vector.load %arg3[%c0_36, %c0_37] : memref<32x32xf32, #tpu.memory_space<vmem>>, vector<32x32xf32>
    %cst_38 = arith.constant dense<0.000000e+00> : vector<16x32xf32>
    %81 = tpu.matmul %79, %80, %cst_38 {dimension_numbers = #tpu.dot_dimension_numbers<[1], [0], [0], [1], [0, 0, 1, 1], [], []>} : vector<16x32xf32>, vector<32x32xf32>, vector<16x32xf32> -> vector<16x32xf32>
    %82 = vector.shape_cast %81 : vector<16x32xf32> to vector<2x8x32xf32>
    %c0_39 = arith.constant 0 : index
    %c0_40 = arith.constant 0 : index
    %c0_41 = arith.constant 0 : index
    %83 = vector.load %arg4[%c0_39, %c0_40, %c0_41] : memref<2x8x32xf32, #tpu.memory_space<vmem>>, vector<2x8x32xf32>
    tpu.vector_store %arg4[%c0_39, %c0_40, %c0_41], %82 {strides = array<i32>} : memref<2x8x32xf32, #tpu.memory_space<vmem>>, vector<2x8x32xf32>,
    return
  }
  func.func @transform_0(%arg0: i32) -> (i32, i32, i32) {
    %c0_i32 = arith.constant 0 : i32
    %c0_i32_0 = arith.constant 0 : i32
    %c0_i32_1 = arith.constant 0 : i32
    return %arg0, %c0_i32, %c0_i32_0 : i32, i32, i32
  }
  func.func @transform_1(%arg0: i32) -> (i32, i32) {
    %c0_i32 = arith.constant 0 : i32
    %c0_i32_0 = arith.constant 0 : i32
    %c0_i32_1 = arith.constant 0 : i32
    return %c0_i32, %c0_i32_0 : i32, i32
  }
  func.func @transform_2(%arg0: i32) -> (i32, i32) {
    %c0_i32 = arith.constant 0 : i32
    %c0_i32_0 = arith.constant 0 : i32
    %c0_i32_1 = arith.constant 0 : i32
    return %c0_i32, %c0_i32_0 : i32, i32
  }
  func.func @transform_3(%arg0: i32) -> (i32, i32, i32) {
    %c0_i32 = arith.constant 0 : i32
    %c0_i32_0 = arith.constant 0 : i32
    %c0_i32_1 = arith.constant 0 : i32
    return %arg0, %c0_i32, %c0_i32_0 : i32, i32, i32
  }
}

</mosaic_0001>

<llo_original>
// kernel: tpu_custom_call.1
$region0: #{tpu_custom_call.1}
  #allocation0 [shape = 'u32[]', space=smem, size = 0x4, offset = 0x4, fixed_abs, tag = 'smem constant byte address 0x4 - core index']
  #allocation1 [shape = 'u32[144,128]{1,0:T(1,128)}', space=vmem, size = 0x12000, scoped, tag = 'internal scratch']
  #allocation2 [shape = 'f32[2,8,32]{2,1,0:T(8,128)}', space=vmem, size = 0x2000, scoped, tag = 'scratch operand']
  %s0 = inlined_call_operand.hbm [shape: f32[2,8,32], index: 0, kind: input, shape index: {}]
  %s1 = inlined_call_operand.hbm [shape: f32[32,96], index: 1, kind: input, shape index: {}]
  %s2 = inlined_call_operand.hbm [shape: f32[32,32], index: 2, kind: input, shape index: {}]
  %s3 = inlined_call_operand.hbm [shape: f32[2,8,32], index: 3, kind: output, shape index: {}]
  %s4 = sld [smem:[#allocation0]]
  $region34: #{tpu_custom_call.1} parent=0
    _
  %s6 = ssub.s32 1, %s4
  %s7 = scalar_select 0, %s6, %s4
  $region1: #{tpu_custom_call.1} parent=0
    #allocation3 [shape = 'u8[8192]{0}', space=vmem, size = 0x2000, scoped, tag = 'input window, operand 0, single buffered']
    #allocation4 [shape = 's32[1]{0}', space=sflag, size = 0x4, scoped, tag = 'scoped memory for tpu_custom_call.1']
    #allocation5 [shape = 's32[1]{0}', space=sflag, size = 0x4, scoped, tag = 'scoped memory for tpu_custom_call.1']
    #allocation6 [shape = 'u8[16384]{0}', space=vmem, size = 0x4000, scoped, tag = 'input window, operand 1, single buffered']
    #allocation7 [shape = 's32[1]{0}', space=sflag, size = 0x4, scoped, tag = 'scoped memory for tpu_custom_call.1']
    #allocation8 [shape = 'u8[16384]{0}', space=vmem, size = 0x4000, scoped, tag = 'input window, operand 2, single buffered']
    #allocation9 [shape = 'u8[8192]{0}', space=vmem, size = 0x2000, scoped, tag = 'output window, operand 0, single buffered']
    %8 = vsyncpa [#allocation4], 0
    %9 = vsyncpa [#allocation7], 0
    %10 = vsyncpa [#allocation5], 0
    // Predicated region
    $region2: #{tpu_custom_call.1} parent=1 // pred_check
      _
    $region3: #{tpu_custom_call.1} parent=1 // pred_check_branch
      %12 = sbr.rel (0) target = $region5
    $region4: #{tpu_custom_call.1} parent=1 // pred_region
      %s14 = ssub.s32 256, 256
      %15 = vsyncadd [#allocation4], %s14
      %s16 = sshll.u32 [#allocation3], 4
      %s17 = int_to_ptr.vmem [resolvable:$true] %s16
      %22 = dma.hbm_to_vmem [thread:$0]  %s0, 256, %s17, [#allocation4], 128, 128, 8
    $region5: #{tpu_custom_call.1} parent=1 // pred_fallthru
      _
    // Predicated region
    $region6: #{tpu_custom_call.1} parent=1 // pred_check
      _
    $region7: #{tpu_custom_call.1} parent=1 // pred_check_branch
      %24 = sbr.rel (0) target = $region9
    $region8: #{tpu_custom_call.1} parent=1 // pred_region
      %s26 = ssub.s32 512, 512
      %27 = vsyncadd [#allocation7], %s26
      %s28 = sshll.u32 [#allocation6], 4
      %s29 = int_to_ptr.vmem [resolvable:$true] %s28
      %34 = dma.hbm_to_vmem [thread:$0]  %s1, 512, %s29, [#allocation7], 128, 128, 8
    $region9: #{tpu_custom_call.1} parent=1 // pred_fallthru
      _
    // Predicated region
    $region10: #{tpu_custom_call.1} parent=1 // pred_check
      _
    $region11: #{tpu_custom_call.1} parent=1 // pred_check_branch
      %36 = sbr.rel (0) target = $region13
    $region12: #{tpu_custom_call.1} parent=1 // pred_region
      %s38 = ssub.s32 512, 512
      %39 = vsyncadd [#allocation7], %s38
      %s40 = sshll.u32 [#allocation8], 4
      %s41 = int_to_ptr.vmem [resolvable:$true] %s40
      %46 = dma.hbm_to_vmem [thread:$0]  %s2, 512, %s41, [#allocation7], 128, 128, 8
    $region13: #{tpu_custom_call.1} parent=1 // pred_fallthru
      _
    // Predicated region
    $region14: #{tpu_custom_call.1} parent=1 // pred_check
      _
    $region15: #{tpu_custom_call.1} parent=1 // pred_check_branch
      %48 = sbr.rel (0) target = $region17
    $region16: #{tpu_custom_call.1} parent=1 // pred_region
      %49 = dma.done [#allocation4], 256
    $region17: #{tpu_custom_call.1} parent=1 // pred_fallthru
      _
    // Predicated region
    $region18: #{tpu_custom_call.1} parent=1 // pred_check
      _
    $region19: #{tpu_custom_call.1} parent=1 // pred_check_branch
      %51 = sbr.rel (0) target = $region21
    $region20: #{tpu_custom_call.1} parent=1 // pred_region
      %52 = dma.done [#allocation7], 512
    $region21: #{tpu_custom_call.1} parent=1 // pred_fallthru
      _
    // Predicated region
    $region22: #{tpu_custom_call.1} parent=1 // pred_check
      _
    $region23: #{tpu_custom_call.1} parent=1 // pred_check_branch
      %54 = sbr.rel (0) target = $region25
    $region24: #{tpu_custom_call.1} parent=1 // pred_region
      %55 = dma.done [#allocation7], 512
    $region25: #{tpu_custom_call.1} parent=1 // pred_fallthru
      _
    %v56 = vld [vmem:[#allocation3] sm:$0xff]
    %v57 = vld [vmem:[#allocation3 + $0x8] sm:$0xff]
    %v58 = vld [vmem:[#allocation6] sm:$0xff]
    %v59 = vld [vmem:[#allocation6 + $0x8] sm:$0xff]
    %v60 = vld [vmem:[#allocation6 + $0x10] sm:$0xff]
    %v61 = vld [vmem:[#allocation6 + $0x18] sm:$0xff]
    %vm62 = vcmask 261120
    %v64 = vsel %vm62, %v56, 0
    %v67 = vsel %vm62, %v57, 0
    %69 = vmatprep.subr.mxu0 0.0
    %70 = vmatpush1.msra.mxu0 %v58
    %71 = vmatprep.subr.mxu0 0.0
    %72 = vmatpush1.msra.mxu0 %v59
    %73 = vmatprep.subr.mxu0 0.0
    %74 = vmatpush1.msra.mxu0 %v60
    %75 = vmatprep.subr.mxu0 0.0
    %76 = vmatpush1.msra.mxu0 %v61
    %77 = vmatprep.subr.mxu0 0.0
    %78 = vmatpush1.msra.mxu0 0.0
    %79 = vmatprep.subr.mxu0 0.0
    %80 = vmatpush1.msra.mxu0 0.0
    %81 = vmatprep.subr.mxu0 0.0
    %82 = vmatpush1.msra.mxu0 0.0
    %83 = vmatprep.subr.mxu0 0.0
    %84 = vmatpush1.msra.mxu0 0.0
    %85 = vmatprep.subr.mxu0 0.0
    %86 = vmatpush1.msra.mxu0 0.0
    %87 = vmatprep.subr.mxu0 0.0
    %88 = vmatpush1.msra.mxu0 0.0
    %89 = vmatprep.subr.mxu0 0.0
    %90 = vmatpush1.msra.mxu0 0.0
    %91 = vmatprep.subr.mxu0 0.0
    %92 = vmatpush1.msra.mxu0 0.0
    %93 = vmatprep.subr.mxu0 0.0
    %94 = vmatpush1.msra.mxu0 0.0
    %95 = vmatprep.subr.mxu0 0.0
    %96 = vmatpush1.msra.mxu0 0.0
    %97 = vmatprep.subr.mxu0 0.0
    %98 = vmatpush1.msra.mxu0 0.0
    %99 = vmatprep.subr.mxu0 0.0
    %100 = vmatpush1.msra.mxu0 0.0
    %101 = vmatprep.subr.mxu0 0.0
    %102 = vmatpush1.msra.mxu0 0.0
    %103 = vmatprep.subr.mxu0 0.0
    %104 = vmatpush1.msra.mxu0 0.0
    %105 = vmatprep.subr.mxu0 0.0
    %106 = vmatpush1.msra.mxu0 0.0
    %107 = vmatprep.subr.mxu0 0.0
    %108 = vmatpush1.msra.mxu0 0.0
    %109 = vmatprep.subr.mxu0 0.0
    %110 = vmatpush1.msra.mxu0 0.0
    %111 = vmatprep.subr.mxu0 0.0
    %112 = vmatpush1.msra.mxu0 0.0
    %113 = vmatprep.subr.mxu0 0.0
    %114 = vmatpush1.msra.mxu0 0.0
    %115 = vmatprep.subr.mxu0 0.0
    %116 = vmatpush1.msra.mxu0 0.0
    %117 = vmatprep.subr.mxu0 0.0
    %118 = vmatpush1.msra.mxu0 0.0
    %119 = vmatprep.subr.mxu0 0.0
    %120 = vmatpush1.msra.mxu0 0.0
    %121 = vmatprep.subr.mxu0 0.0
    %122 = vmatpush1.msra.mxu0 0.0
    %123 = vmatprep.subr.mxu0 0.0
    %124 = vmatpush1.msra.mxu0 0.0
    %125 = vmatprep.subr.mxu0 0.0
    %126 = vmatpush1.msra.mxu0 0.0
    %127 = vmatprep.subr.mxu0 0.0
    %128 = vmatpush1.msra.mxu0 0.0
    %129 = vmatprep.subr.mxu0 0.0
    %130 = vmatpush1.msra.mxu0 0.0
    %131 = vmatprep.subr.mxu0 0.0
    %132 = vmatpush1.msra.mxu0 0.0
    %133 = vmatprep.mubr.f32.mxu0 0.0
    %134 = vmatmul.mubr.f32.gmra.mrb[0].mxu0 %v64
    %v135 = vpop.f32.mrb[0].mxu0
    %v136 = vadd.f32 0.0, %v135
    %v137 = vpop.f32.mrb[0].mxu0
    %138 = vmatprep.mubr.f32.mxu0 0.0
    %139 = vmatmul.mubr.f32.gmra.mrb[0].mxu0 %v67
    %v140 = vpop.f32.mrb[0].mxu0
    %v141 = vadd.f32 0.0, %v140
    %v142 = vpop.f32.mrb[0].mxu0
    %143 = vdwg.mxu0
    %145 = vrot.lane.b32.xlu0 %v136, 96
    %v146 = vpop.permute.xlu0 %145
    %vm147 = vcmask 64512
    %v148 = vsel %vm147, %v136, 0
    %v150 = vsel %vm147, %v146, 0
    %152 = vmatprep.subr.mxu0 0.0
    %153 = vmatpush1.xpose.msra.mxu0 %v150
    %154 = vmatprep.subr.mxu0 0.0
    %155 = vmatpush1.xpose.msra.mxu0 0.0
    %156 = vmatprep.subr.mxu0 0.0
    %157 = vmatpush1.xpose.msra.mxu0 0.0
    %158 = vmatprep.subr.mxu0 0.0
    %159 = vmatpush1.xpose.msra.mxu0 0.0
    %160 = vmatprep.subr.mxu0 0.0
    %161 = vmatpush1.xpose.msra.mxu0 0.0
    %162 = vmatprep.subr.mxu0 0.0
    %163 = vmatpush1.xpose.msra.mxu0 0.0
    %164 = vmatprep.subr.mxu0 0.0
    %165 = vmatpush1.xpose.msra.mxu0 0.0
    %166 = vmatprep.subr.mxu0 0.0
    %167 = vmatpush1.xpose.msra.mxu0 0.0
    %168 = vmatprep.subr.mxu0 0.0
    %169 = vmatpush1.xpose.msra.mxu0 0.0
    %170 = vmatprep.subr.mxu0 0.0
    %171 = vmatpush1.xpose.msra.mxu0 0.0
    %172 = vmatprep.subr.mxu0 0.0
    %173 = vmatpush1.xpose.msra.mxu0 0.0
    %174 = vmatprep.subr.mxu0 0.0
    %175 = vmatpush1.xpose.msra.mxu0 0.0
    %176 = vmatprep.subr.mxu0 0.0
    %177 = vmatpush1.xpose.msra.mxu0 0.0
    %178 = vmatprep.subr.mxu0 0.0
    %179 = vmatpush1.xpose.msra.mxu0 0.0
    %180 = vmatprep.subr.mxu0 0.0
    %181 = vmatpush1.xpose.msra.mxu0 0.0
    %182 = vmatprep.subr.mxu0 0.0
    %183 = vmatpush1.xpose.msra.mxu0 0.0
    %184 = vmatprep.subr.mxu0 0.0
    %185 = vmatpush1.xpose.msra.mxu0 0.0
    %186 = vmatprep.subr.mxu0 0.0
    %187 = vmatpush1.xpose.msra.mxu0 0.0
    %188 = vmatprep.subr.mxu0 0.0
    %189 = vmatpush1.xpose.msra.mxu0 0.0
    %190 = vmatprep.subr.mxu0 0.0
    %191 = vmatpush1.xpose.msra.mxu0 0.0
    %192 = vmatprep.subr.mxu0 0.0
    %193 = vmatpush1.xpose.msra.mxu0 0.0
    %194 = vmatprep.subr.mxu0 0.0
    %195 = vmatpush1.xpose.msra.mxu0 0.0
    %196 = vmatprep.subr.mxu0 0.0
    %197 = vmatpush1.xpose.msra.mxu0 0.0
    %198 = vmatprep.subr.mxu0 0.0
    %199 = vmatpush1.xpose.msra.mxu0 0.0
    %200 = vmatprep.subr.mxu0 0.0
    %201 = vmatpush1.xpose.msra.mxu0 0.0
    %202 = vmatprep.subr.mxu0 0.0
    %203 = vmatpush1.xpose.msra.mxu0 0.0
    %204 = vmatprep.subr.mxu0 0.0
    %205 = vmatpush1.xpose.msra.mxu0 0.0
    %206 = vmatprep.subr.mxu0 0.0
    %207 = vmatpush1.xpose.msra.mxu0 0.0
    %208 = vmatprep.subr.mxu0 0.0
    %209 = vmatpush1.xpose.msra.mxu0 0.0
    %210 = vmatprep.subr.mxu0 0.0
    %211 = vmatpush1.xpose.msra.mxu0 0.0
    %212 = vmatprep.subr.mxu0 0.0
    %213 = vmatpush1.xpose.msra.mxu0 0.0
    %214 = vmatprep.subr.mxu0 0.0
    %215 = vmatpush1.xpose.msra.mxu0 0.0
    %216 = vmatprep.mubr.f32.mxu0 0.0
    %217 = vmatmul.mubr.f32.gmra.mrb[0].mxu0 %v148
    %v218 = vpop.f32.mrb[0].mxu0
    %v219 = vadd.f32 0.0, %v218
    %v220 = vpop.f32.mrb[0].mxu0
    %221 = vdwg.mxu0
    %223 = vrot.lane.b32.xlu0 %v141, 96
    %v224 = vpop.permute.xlu0 %223
    %v225 = vsel %vm147, %v141, 0
    %v227 = vsel %vm147, %v224, 0
    %229 = vmatprep.subr.mxu0 0.0
    %230 = vmatpush1.xpose.msra.mxu0 %v227
    %231 = vmatprep.subr.mxu0 0.0
    %232 = vmatpush1.xpose.msra.mxu0 0.0
    %233 = vmatprep.subr.mxu0 0.0
    %234 = vmatpush1.xpose.msra.mxu0 0.0
    %235 = vmatprep.subr.mxu0 0.0
    %236 = vmatpush1.xpose.msra.mxu0 0.0
    %237 = vmatprep.subr.mxu0 0.0
    %238 = vmatpush1.xpose.msra.mxu0 0.0
    %239 = vmatprep.subr.mxu0 0.0
    %240 = vmatpush1.xpose.msra.mxu0 0.0
    %241 = vmatprep.subr.mxu0 0.0
    %242 = vmatpush1.xpose.msra.mxu0 0.0
    %243 = vmatprep.subr.mxu0 0.0
    %244 = vmatpush1.xpose.msra.mxu0 0.0
    %245 = vmatprep.subr.mxu0 0.0
    %246 = vmatpush1.xpose.msra.mxu0 0.0
    %247 = vmatprep.subr.mxu0 0.0
    %248 = vmatpush1.xpose.msra.mxu0 0.0
    %249 = vmatprep.subr.mxu0 0.0
    %250 = vmatpush1.xpose.msra.mxu0 0.0
    %251 = vmatprep.subr.mxu0 0.0
    %252 = vmatpush1.xpose.msra.mxu0 0.0
    %253 = vmatprep.subr.mxu0 0.0
    %254 = vmatpush1.xpose.msra.mxu0 0.0
    %255 = vmatprep.subr.mxu0 0.0
    %256 = vmatpush1.xpose.msra.mxu0 0.0
    %257 = vmatprep.subr.mxu0 0.0
    %258 = vmatpush1.xpose.msra.mxu0 0.0
    %259 = vmatprep.subr.mxu0 0.0
    %260 = vmatpush1.xpose.msra.mxu0 0.0
    %261 = vmatprep.subr.mxu0 0.0
    %262 = vmatpush1.xpose.msra.mxu0 0.0
    %263 = vmatprep.subr.mxu0 0.0
    %264 = vmatpush1.xpose.msra.mxu0 0.0
    %265 = vmatprep.subr.mxu0 0.0
    %266 = vmatpush1.xpose.msra.mxu0 0.0
    %267 = vmatprep.subr.mxu0 0.0
    %268 = vmatpush1.xpose.msra.mxu0 0.0
    %269 = vmatprep.subr.mxu0 0.0
    %270 = vmatpush1.xpose.msra.mxu0 0.0
    %271 = vmatprep.subr.mxu0 0.0
    %272 = vmatpush1.xpose.msra.mxu0 0.0
    %273 = vmatprep.subr.mxu0 0.0
    %274 = vmatpush1.xpose.msra.mxu0 0.0
    %275 = vmatprep.subr.mxu0 0.0
    %276 = vmatpush1.xpose.msra.mxu0 0.0
    %277 = vmatprep.subr.mxu0 0.0
    %278 = vmatpush1.xpose.msra.mxu0 0.0
    %279 = vmatprep.subr.mxu0 0.0
    %280 = vmatpush1.xpose.msra.mxu0 0.0
    %281 = vmatprep.subr.mxu0 0.0
    %282 = vmatpush1.xpose.msra.mxu0 0.0
    %283 = vmatprep.subr.mxu0 0.0
    %284 = vmatpush1.xpose.msra.mxu0 0.0
    %285 = vmatprep.subr.mxu0 0.0
    %286 = vmatpush1.xpose.msra.mxu0 0.0
    %287 = vmatprep.subr.mxu0 0.0
    %288 = vmatpush1.xpose.msra.mxu0 0.0
    %289 = vmatprep.subr.mxu0 0.0
    %290 = vmatpush1.xpose.msra.mxu0 0.0
    %291 = vmatprep.subr.mxu0 0.0
    %292 = vmatpush1.xpose.msra.mxu0 0.0
    %293 = vmatprep.mubr.f32.mxu0 0.0
    %294 = vmatmul.mubr.f32.gmra.mrb[0].mxu0 %v225
    %v295 = vpop.f32.mrb[0].mxu0
    %v296 = vadd.f32 0.0, %v295
    %v297 = vpop.f32.mrb[0].mxu0
    %298 = vdwg.mxu0
    %v299 = vsel %vm147, %v219, -inf
    %300 = vmax.xlane.f32.xlu0 %v299
    %v301 = vpop.xlane.xlu0 %300
    %v302 = vsel %vm147, %v296, -inf
    %303 = vmax.xlane.f32.xlu0 %v302
    %v304 = vpop.xlane.xlu0 %303
    %v305 = vsub.f32 %v219, %v301
    %v306 = vsub.f32 %v296, %v304
    %v307 = vmul.f32 %v305, 1.442695
    %v308 = vpow.pop %v307
    %v309 = vmul.f32 %v306, 1.442695
    %v310 = vpow.pop %v309
    %v311 = vsel %vm147, %v308, 0.0
    %312 = vadd.xlane.f32.xlu0 %v311
    %v313 = vpop.xlane.xlu0 %312
    %v314 = vsel %vm147, %v310, 0.0
    %315 = vadd.xlane.f32.xlu0 %v314
    %v316 = vpop.xlane.xlu0 %315
    %v317 = vrcp.pop %v313
    %v318 = vmul.f32 1.0, %v317
    %v319 = vrcp.pop %v316
    %v320 = vmul.f32 1.0, %v319
    %v321 = vmul.f32 %v308, %v318
    %v322 = vmul.f32 %v310, %v320
    %323 = vrot.lane.b32.xlu0 %v136, 64
    %v324 = vpop.permute.xlu0 %323
    %v327 = vsel %vm147, %v321, 0
    %329 = vmatprep.subr.mxu0 0.0
    %330 = vmatpush1.msra.mxu0 %v324
    %331 = vmatprep.subr.mxu0 0.0
    %332 = vmatpush1.msra.mxu0 0.0
    %333 = vmatprep.subr.mxu0 0.0
    %334 = vmatpush1.msra.mxu0 0.0
    %335 = vmatprep.subr.mxu0 0.0
    %336 = vmatpush1.msra.mxu0 0.0
    %337 = vmatprep.subr.mxu0 0.0
    %338 = vmatpush1.msra.mxu0 0.0
    %339 = vmatprep.subr.mxu0 0.0
    %340 = vmatpush1.msra.mxu0 0.0
    %341 = vmatprep.subr.mxu0 0.0
    %342 = vmatpush1.msra.mxu0 0.0
    %343 = vmatprep.subr.mxu0 0.0
    %344 = vmatpush1.msra.mxu0 0.0
    %345 = vmatprep.subr.mxu0 0.0
    %346 = vmatpush1.msra.mxu0 0.0
    %347 = vmatprep.subr.mxu0 0.0
    %348 = vmatpush1.msra.mxu0 0.0
    %349 = vmatprep.subr.mxu0 0.0
    %350 = vmatpush1.msra.mxu0 0.0
    %351 = vmatprep.subr.mxu0 0.0
    %352 = vmatpush1.msra.mxu0 0.0
    %353 = vmatprep.subr.mxu0 0.0
    %354 = vmatpush1.msra.mxu0 0.0
    %355 = vmatprep.subr.mxu0 0.0
    %356 = vmatpush1.msra.mxu0 0.0
    %357 = vmatprep.subr.mxu0 0.0
    %358 = vmatpush1.msra.mxu0 0.0
    %359 = vmatprep.subr.mxu0 0.0
    %360 = vmatpush1.msra.mxu0 0.0
    %361 = vmatprep.subr.mxu0 0.0
    %362 = vmatpush1.msra.mxu0 0.0
    %363 = vmatprep.subr.mxu0 0.0
    %364 = vmatpush1.msra.mxu0 0.0
    %365 = vmatprep.subr.mxu0 0.0
    %366 = vmatpush1.msra.mxu0 0.0
    %367 = vmatprep.subr.mxu0 0.0
    %368 = vmatpush1.msra.mxu0 0.0
    %369 = vmatprep.subr.mxu0 0.0
    %370 = vmatpush1.msra.mxu0 0.0
    %371 = vmatprep.subr.mxu0 0.0
    %372 = vmatpush1.msra.mxu0 0.0
    %373 = vmatprep.subr.mxu0 0.0
    %374 = vmatpush1.msra.mxu0 0.0
    %375 = vmatprep.subr.mxu0 0.0
    %376 = vmatpush1.msra.mxu0 0.0
    %377 = vmatprep.subr.mxu0 0.0
    %378 = vmatpush1.msra.mxu0 0.0
    %379 = vmatprep.subr.mxu0 0.0
    %380 = vmatpush1.msra.mxu0 0.0
    %381 = vmatprep.subr.mxu0 0.0
    %382 = vmatpush1.msra.mxu0 0.0
    %383 = vmatprep.subr.mxu0 0.0
    %384 = vmatpush1.msra.mxu0 0.0
    %385 = vmatprep.subr.mxu0 0.0
    %386 = vmatpush1.msra.mxu0 0.0
    %387 = vmatprep.subr.mxu0 0.0
    %388 = vmatpush1.msra.mxu0 0.0
    %389 = vmatprep.subr.mxu0 0.0
    %390 = vmatpush1.msra.mxu0 0.0
    %391 = vmatprep.subr.mxu0 0.0
    %392 = vmatpush1.msra.mxu0 0.0
    %393 = vmatprep.mubr.f32.mxu0 0.0
    %394 = vmatmul.mubr.f32.gmra.mrb[0].mxu0 %v327
    %v395 = vpop.f32.mrb[0].mxu0
    %v396 = vadd.f32 0.0, %v395
    %v397 = vpop.f32.mrb[0].mxu0
    %398 = vdwg.mxu0
    %399 = vrot.lane.b32.xlu0 %v141, 64
    %v400 = vpop.permute.xlu0 %399
    %v403 = vsel %vm147, %v322, 0
    %405 = vmatprep.subr.mxu0 0.0
    %406 = vmatpush1.msra.mxu0 %v400
    %407 = vmatprep.subr.mxu0 0.0
    %408 = vmatpush1.msra.mxu0 0.0
    %409 = vmatprep.subr.mxu0 0.0
    %410 = vmatpush1.msra.mxu0 0.0
    %411 = vmatprep.subr.mxu0 0.0
    %412 = vmatpush1.msra.mxu0 0.0
    %413 = vmatprep.subr.mxu0 0.0
    %414 = vmatpush1.msra.mxu0 0.0
    %415 = vmatprep.subr.mxu0 0.0
    %416 = vmatpush1.msra.mxu0 0.0
    %417 = vmatprep.subr.mxu0 0.0
    %418 = vmatpush1.msra.mxu0 0.0
    %419 = vmatprep.subr.mxu0 0.0
    %420 = vmatpush1.msra.mxu0 0.0
    %421 = vmatprep.subr.mxu0 0.0
    %422 = vmatpush1.msra.mxu0 0.0
    %423 = vmatprep.subr.mxu0 0.0
    %424 = vmatpush1.msra.mxu0 0.0
    %425 = vmatprep.subr.mxu0 0.0
    %426 = vmatpush1.msra.mxu0 0.0
    %427 = vmatprep.subr.mxu0 0.0
    %428 = vmatpush1.msra.mxu0 0.0
    %429 = vmatprep.subr.mxu0 0.0
    %430 = vmatpush1.msra.mxu0 0.0
    %431 = vmatprep.subr.mxu0 0.0
    %432 = vmatpush1.msra.mxu0 0.0
    %433 = vmatprep.subr.mxu0 0.0
    %434 = vmatpush1.msra.mxu0 0.0
    %435 = vmatprep.subr.mxu0 0.0
    %436 = vmatpush1.msra.mxu0 0.0
    %437 = vmatprep.subr.mxu0 0.0
    %438 = vmatpush1.msra.mxu0 0.0
    %439 = vmatprep.subr.mxu0 0.0
    %440 = vmatpush1.msra.mxu0 0.0
    %441 = vmatprep.subr.mxu0 0.0
    %442 = vmatpush1.msra.mxu0 0.0
    %443 = vmatprep.subr.mxu0 0.0
    %444 = vmatpush1.msra.mxu0 0.0
    %445 = vmatprep.subr.mxu0 0.0
    %446 = vmatpush1.msra.mxu0 0.0
    %447 = vmatprep.subr.mxu0 0.0
    %448 = vmatpush1.msra.mxu0 0.0
    %449 = vmatprep.subr.mxu0 0.0
    %450 = vmatpush1.msra.mxu0 0.0
    %451 = vmatprep.subr.mxu0 0.0
    %452 = vmatpush1.msra.mxu0 0.0
    %453 = vmatprep.subr.mxu0 0.0
    %454 = vmatpush1.msra.mxu0 0.0
    %455 = vmatprep.subr.mxu0 0.0
    %456 = vmatpush1.msra.mxu0 0.0
    %457 = vmatprep.subr.mxu0 0.0
    %458 = vmatpush1.msra.mxu0 0.0
    %459 = vmatprep.subr.mxu0 0.0
    %460 = vmatpush1.msra.mxu0 0.0
    %461 = vmatprep.subr.mxu0 0.0
    %462 = vmatpush1.msra.mxu0 0.0
    %463 = vmatprep.subr.mxu0 0.0
    %464 = vmatpush1.msra.mxu0 0.0
    %465 = vmatprep.subr.mxu0 0.0
    %466 = vmatpush1.msra.mxu0 0.0
    %467 = vmatprep.subr.mxu0 0.0
    %468 = vmatpush1.msra.mxu0 0.0
    %469 = vmatprep.mubr.f32.mxu0 0.0
    %470 = vmatmul.mubr.f32.gmra.mrb[0].mxu0 %v403
    %v471 = vpop.f32.mrb[0].mxu0
    %v472 = vadd.f32 0.0, %v471
    %v473 = vpop.f32.mrb[0].mxu0
    %474 = vdwg.mxu0
    %475 = vst.msk [vmem:[#allocation2] sm:$0xff] %vm147, %v396
    %476 = vst.msk [vmem:[#allocation2 + $0x8] sm:$0xff] %vm147, %v472
    %477 = vrot.lane.b32.xlu0 %v136, 120
    %v478 = vpop.permute.xlu0 %477
    %479 = vrot.lane.b32.xlu0 %v136, 88
    %v480 = vpop.permute.xlu0 %479
    %v481 = vsel %vm147, %v478, 0
    %v483 = vsel %vm147, %v480, 0
    %485 = vmatprep.subr.mxu0 0.0
    %486 = vmatpush1.xpose.msra.mxu0 %v483
    %487 = vmatprep.subr.mxu0 0.0
    %488 = vmatpush1.xpose.msra.mxu0 0.0
    %489 = vmatprep.subr.mxu0 0.0
    %490 = vmatpush1.xpose.msra.mxu0 0.0
    %491 = vmatprep.subr.mxu0 0.0
    %492 = vmatpush1.xpose.msra.mxu0 0.0
    %493 = vmatprep.subr.mxu0 0.0
    %494 = vmatpush1.xpose.msra.mxu0 0.0
    %495 = vmatprep.subr.mxu0 0.0
    %496 = vmatpush1.xpose.msra.mxu0 0.0
    %497 = vmatprep.subr.mxu0 0.0
    %498 = vmatpush1.xpose.msra.mxu0 0.0
    %499 = vmatprep.subr.mxu0 0.0
    %500 = vmatpush1.xpose.msra.mxu0 0.0
    %501 = vmatprep.subr.mxu0 0.0
    %502 = vmatpush1.xpose.msra.mxu0 0.0
    %503 = vmatprep.subr.mxu0 0.0
    %504 = vmatpush1.xpose.msra.mxu0 0.0
    %505 = vmatprep.subr.mxu0 0.0
    %506 = vmatpush1.xpose.msra.mxu0 0.0
    %507 = vmatprep.subr.mxu0 0.0
    %508 = vmatpush1.xpose.msra.mxu0 0.0
    %509 = vmatprep.subr.mxu0 0.0
    %510 = vmatpush1.xpose.msra.mxu0 0.0
    %511 = vmatprep.subr.mxu0 0.0
    %512 = vmatpush1.xpose.msra.mxu0 0.0
    %513 = vmatprep.subr.mxu0 0.0
    %514 = vmatpush1.xpose.msra.mxu0 0.0
    %515 = vmatprep.subr.mxu0 0.0
    %516 = vmatpush1.xpose.msra.mxu0 0.0
    %517 = vmatprep.subr.mxu0 0.0
    %518 = vmatpush1.xpose.msra.mxu0 0.0
    %519 = vmatprep.subr.mxu0 0.0
    %520 = vmatpush1.xpose.msra.mxu0 0.0
    %521 = vmatprep.subr.mxu0 0.0
    %522 = vmatpush1.xpose.msra.mxu0 0.0
    %523 = vmatprep.subr.mxu0 0.0
    %524 = vmatpush1.xpose.msra.mxu0 0.0
    %525 = vmatprep.subr.mxu0 0.0
    %526 = vmatpush1.xpose.msra.mxu0 0.0
    %527 = vmatprep.subr.mxu0 0.0
    %528 = vmatpush1.xpose.msra.mxu0 0.0
    %529 = vmatprep.subr.mxu0 0.0
    %530 = vmatpush1.xpose.msra.mxu0 0.0
    %531 = vmatprep.subr.mxu0 0.0
    %532 = vmatpush1.xpose.msra.mxu0 0.0
    %533 = vmatprep.subr.mxu0 0.0
    %534 = vmatpush1.xpose.msra.mxu0 0.0
    %535 = vmatprep.subr.mxu0 0.0
    %536 = vmatpush1.xpose.msra.mxu0 0.0
    %537 = vmatprep.subr.mxu0 0.0
    %538 = vmatpush1.xpose.msra.mxu0 0.0
    %539 = vmatprep.subr.mxu0 0.0
    %540 = vmatpush1.xpose.msra.mxu0 0.0
    %541 = vmatprep.subr.mxu0 0.0
    %542 = vmatpush1.xpose.msra.mxu0 0.0
    %543 = vmatprep.subr.mxu0 0.0
    %544 = vmatpush1.xpose.msra.mxu0 0.0
    %545 = vmatprep.subr.mxu0 0.0
    %546 = vmatpush1.xpose.msra.mxu0 0.0
    %547 = vmatprep.subr.mxu0 0.0
    %548 = vmatpush1.xpose.msra.mxu0 0.0
    %549 = vmatprep.mubr.f32.mxu0 0.0
    %550 = vmatmul.mubr.f32.gmra.mrb[0].mxu0 %v481
    %v551 = vpop.f32.mrb[0].mxu0
    %v552 = vadd.f32 0.0, %v551
    %v553 = vpop.f32.mrb[0].mxu0
    %554 = vdwg.mxu0
    %555 = vrot.lane.b32.xlu0 %v141, 120
    %v556 = vpop.permute.xlu0 %555
    %557 = vrot.lane.b32.xlu0 %v141, 88
    %v558 = vpop.permute.xlu0 %557
    %v559 = vsel %vm147, %v556, 0
    %v561 = vsel %vm147, %v558, 0
    %563 = vmatprep.subr.mxu0 0.0
    %564 = vmatpush1.xpose.msra.mxu0 %v561
    %565 = vmatprep.subr.mxu0 0.0
    %566 = vmatpush1.xpose.msra.mxu0 0.0
    %567 = vmatprep.subr.mxu0 0.0
    %568 = vmatpush1.xpose.msra.mxu0 0.0
    %569 = vmatprep.subr.mxu0 0.0
    %570 = vmatpush1.xpose.msra.mxu0 0.0
    %571 = vmatprep.subr.mxu0 0.0
    %572 = vmatpush1.xpose.msra.mxu0 0.0
    %573 = vmatprep.subr.mxu0 0.0
    %574 = vmatpush1.xpose.msra.mxu0 0.0
    %575 = vmatprep.subr.mxu0 0.0
    %576 = vmatpush1.xpose.msra.mxu0 0.0
    %577 = vmatprep.subr.mxu0 0.0
    %578 = vmatpush1.xpose.msra.mxu0 0.0
    %579 = vmatprep.subr.mxu0 0.0
    %580 = vmatpush1.xpose.msra.mxu0 0.0
    %581 = vmatprep.subr.mxu0 0.0
    %582 = vmatpush1.xpose.msra.mxu0 0.0
    %583 = vmatprep.subr.mxu0 0.0
    %584 = vmatpush1.xpose.msra.mxu0 0.0
    %585 = vmatprep.subr.mxu0 0.0
    %586 = vmatpush1.xpose.msra.mxu0 0.0
    %587 = vmatprep.subr.mxu0 0.0
    %588 = vmatpush1.xpose.msra.mxu0 0.0
    %589 = vmatprep.subr.mxu0 0.0
    %590 = vmatpush1.xpose.msra.mxu0 0.0
    %591 = vmatprep.subr.mxu0 0.0
    %592 = vmatpush1.xpose.msra.mxu0 0.0
    %593 = vmatprep.subr.mxu0 0.0
    %594 = vmatpush1.xpose.msra.mxu0 0.0
    %595 = vmatprep.subr.mxu0 0.0
    %596 = vmatpush1.xpose.msra.mxu0 0.0
    %597 = vmatprep.subr.mxu0 0.0
    %598 = vmatpush1.xpose.msra.mxu0 0.0
    %599 = vmatprep.subr.mxu0 0.0
    %600 = vmatpush1.xpose.msra.mxu0 0.0
    %601 = vmatprep.subr.mxu0 0.0
    %602 = vmatpush1.xpose.msra.mxu0 0.0
    %603 = vmatprep.subr.mxu0 0.0
    %604 = vmatpush1.xpose.msra.mxu0 0.0
    %605 = vmatprep.subr.mxu0 0.0
    %606 = vmatpush1.xpose.msra.mxu0 0.0
    %607 = vmatprep.subr.mxu0 0.0
    %608 = vmatpush1.xpose.msra.mxu0 0.0
    %609 = vmatprep.subr.mxu0 0.0
    %610 = vmatpush1.xpose.msra.mxu0 0.0
    %611 = vmatprep.subr.mxu0 0.0
    %612 = vmatpush1.xpose.msra.mxu0 0.0
    %613 = vmatprep.subr.mxu0 0.0
    %614 = vmatpush1.xpose.msra.mxu0 0.0
    %615 = vmatprep.subr.mxu0 0.0
    %616 = vmatpush1.xpose.msra.mxu0 0.0
    %617 = vmatprep.subr.mxu0 0.0
    %618 = vmatpush1.xpose.msra.mxu0 0.0
    %619 = vmatprep.subr.mxu0 0.0
    %620 = vmatpush1.xpose.msra.mxu0 0.0
    %621 = vmatprep.subr.mxu0 0.0
    %622 = vmatpush1.xpose.msra.mxu0 0.0
    %623 = vmatprep.subr.mxu0 0.0
    %624 = vmatpush1.xpose.msra.mxu0 0.0
    %625 = vmatprep.subr.mxu0 0.0
    %626 = vmatpush1.xpose.msra.mxu0 0.0
    %627 = vmatprep.mubr.f32.mxu0 0.0
    %628 = vmatmul.mubr.f32.gmra.mrb[0].mxu0 %v559
    %v629 = vpop.f32.mrb[0].mxu0
    %v630 = vadd.f32 0.0, %v629
    %v631 = vpop.f32.mrb[0].mxu0
    %632 = vdwg.mxu0
    %v633 = vsel %vm147, %v552, -inf
    %634 = vmax.xlane.f32.xlu0 %v633
    %v635 = vpop.xlane.xlu0 %634
    %v636 = vsel %vm147, %v630, -inf
    %637 = vmax.xlane.f32.xlu0 %v636
    %v638 = vpop.xlane.xlu0 %637
    %v639 = vsub.f32 %v552, %v635
    %v640 = vsub.f32 %v630, %v638
    %v641 = vmul.f32 %v639, 1.442695
    %v642 = vpow.pop %v641
    %v643 = vmul.f32 %v640, 1.442695
    %v644 = vpow.pop %v643
    %v645 = vsel %vm147, %v642, 0.0
    %646 = vadd.xlane.f32.xlu0 %v645
    %v647 = vpop.xlane.xlu0 %646
    %v648 = vsel %vm147, %v644, 0.0
    %649 = vadd.xlane.f32.xlu0 %v648
    %v650 = vpop.xlane.xlu0 %649
    %v651 = vrcp.pop %v647
    %v652 = vmul.f32 1.0, %v651
    %v653 = vrcp.pop %v650
    %v654 = vmul.f32 1.0, %v653
    %v655 = vmul.f32 %v642, %v652
    %v656 = vmul.f32 %v644, %v654
    %657 = vrot.lane.b32.xlu0 %v136, 56
    %v658 = vpop.permute.xlu0 %657
    %v661 = vsel %vm147, %v655, 0
    %663 = vmatprep.subr.mxu0 0.0
    %664 = vmatpush1.msra.mxu0 %v658
    %665 = vmatprep.subr.mxu0 0.0
    %666 = vmatpush1.msra.mxu0 0.0
    %667 = vmatprep.subr.mxu0 0.0
    %668 = vmatpush1.msra.mxu0 0.0
    %669 = vmatprep.subr.mxu0 0.0
    %670 = vmatpush1.msra.mxu0 0.0
    %671 = vmatprep.subr.mxu0 0.0
    %672 = vmatpush1.msra.mxu0 0.0
    %673 = vmatprep.subr.mxu0 0.0
    %674 = vmatpush1.msra.mxu0 0.0
    %675 = vmatprep.subr.mxu0 0.0
    %676 = vmatpush1.msra.mxu0 0.0
    %677 = vmatprep.subr.mxu0 0.0
    %678 = vmatpush1.msra.mxu0 0.0
    %679 = vmatprep.subr.mxu0 0.0
    %680 = vmatpush1.msra.mxu0 0.0
    %681 = vmatprep.subr.mxu0 0.0
    %682 = vmatpush1.msra.mxu0 0.0
    %683 = vmatprep.subr.mxu0 0.0
    %684 = vmatpush1.msra.mxu0 0.0
    %685 = vmatprep.subr.mxu0 0.0
    %686 = vmatpush1.msra.mxu0 0.0
    %687 = vmatprep.subr.mxu0 0.0
    %688 = vmatpush1.msra.mxu0 0.0
    %689 = vmatprep.subr.mxu0 0.0
    %690 = vmatpush1.msra.mxu0 0.0
    %691 = vmatprep.subr.mxu0 0.0
    %692 = vmatpush1.msra.mxu0 0.0
    %693 = vmatprep.subr.mxu0 0.0
    %694 = vmatpush1.msra.mxu0 0.0
    %695 = vmatprep.subr.mxu0 0.0
    %696 = vmatpush1.msra.mxu0 0.0
    %697 = vmatprep.subr.mxu0 0.0
    %698 = vmatpush1.msra.mxu0 0.0
    %699 = vmatprep.subr.mxu0 0.0
    %700 = vmatpush1.msra.mxu0 0.0
    %701 = vmatprep.subr.mxu0 0.0
    %702 = vmatpush1.msra.mxu0 0.0
    %703 = vmatprep.subr.mxu0 0.0
    %704 = vmatpush1.msra.mxu0 0.0
    %705 = vmatprep.subr.mxu0 0.0
    %706 = vmatpush1.msra.mxu0 0.0
    %707 = vmatprep.subr.mxu0 0.0
    %708 = vmatpush1.msra.mxu0 0.0
    %709 = vmatprep.subr.mxu0 0.0
    %710 = vmatpush1.msra.mxu0 0.0
    %711 = vmatprep.subr.mxu0 0.0
    %712 = vmatpush1.msra.mxu0 0.0
    %713 = vmatprep.subr.mxu0 0.0
    %714 = vmatpush1.msra.mxu0 0.0
    %715 = vmatprep.subr.mxu0 0.0
    %716 = vmatpush1.msra.mxu0 0.0
    %717 = vmatprep.subr.mxu0 0.0
    %718 = vmatpush1.msra.mxu0 0.0
    %719 = vmatprep.subr.mxu0 0.0
    %720 = vmatpush1.msra.mxu0 0.0
    %721 = vmatprep.subr.mxu0 0.0
    %722 = vmatpush1.msra.mxu0 0.0
    %723 = vmatprep.subr.mxu0 0.0
    %724 = vmatpush1.msra.mxu0 0.0
    %725 = vmatprep.subr.mxu0 0.0
    %726 = vmatpush1.msra.mxu0 0.0
    %727 = vmatprep.mubr.f32.mxu0 0.0
    %728 = vmatmul.mubr.f32.gmra.mrb[0].mxu0 %v661
    %v729 = vpop.f32.mrb[0].mxu0
    %v730 = vadd.f32 0.0, %v729
    %v731 = vpop.f32.mrb[0].mxu0
    %732 = vdwg.mxu0
    %733 = vrot.lane.b32.xlu0 %v141, 56
    %v734 = vpop.permute.xlu0 %733
    %v737 = vsel %vm147, %v656, 0
    %739 = vmatprep.subr.mxu0 0.0
    %740 = vmatpush1.msra.mxu0 %v734
    %741 = vmatprep.subr.mxu0 0.0
    %742 = vmatpush1.msra.mxu0 0.0
    %743 = vmatprep.subr.mxu0 0.0
    %744 = vmatpush1.msra.mxu0 0.0
    %745 = vmatprep.subr.mxu0 0.0
    %746 = vmatpush1.msra.mxu0 0.0
    %747 = vmatprep.subr.mxu0 0.0
    %748 = vmatpush1.msra.mxu0 0.0
    %749 = vmatprep.subr.mxu0 0.0
    %750 = vmatpush1.msra.mxu0 0.0
    %751 = vmatprep.subr.mxu0 0.0
    %752 = vmatpush1.msra.mxu0 0.0
    %753 = vmatprep.subr.mxu0 0.0
    %754 = vmatpush1.msra.mxu0 0.0
    %755 = vmatprep.subr.mxu0 0.0
    %756 = vmatpush1.msra.mxu0 0.0
    %757 = vmatprep.subr.mxu0 0.0
    %758 = vmatpush1.msra.mxu0 0.0
    %759 = vmatprep.subr.mxu0 0.0
    %760 = vmatpush1.msra.mxu0 0.0
    %761 = vmatprep.subr.mxu0 0.0
    %762 = vmatpush1.msra.mxu0 0.0
    %763 = vmatprep.subr.mxu0 0.0
    %764 = vmatpush1.msra.mxu0 0.0
    %765 = vmatprep.subr.mxu0 0.0
    %766 = vmatpush1.msra.mxu0 0.0
    %767 = vmatprep.subr.mxu0 0.0
    %768 = vmatpush1.msra.mxu0 0.0
    %769 = vmatprep.subr.mxu0 0.0
    %770 = vmatpush1.msra.mxu0 0.0
    %771 = vmatprep.subr.mxu0 0.0
    %772 = vmatpush1.msra.mxu0 0.0
    %773 = vmatprep.subr.mxu0 0.0
    %774 = vmatpush1.msra.mxu0 0.0
    %775 = vmatprep.subr.mxu0 0.0
    %776 = vmatpush1.msra.mxu0 0.0
    %777 = vmatprep.subr.mxu0 0.0
    %778 = vmatpush1.msra.mxu0 0.0
    %779 = vmatprep.subr.mxu0 0.0
    %780 = vmatpush1.msra.mxu0 0.0
    %781 = vmatprep.subr.mxu0 0.0
    %782 = vmatpush1.msra.mxu0 0.0
    %783 = vmatprep.subr.mxu0 0.0
    %784 = vmatpush1.msra.mxu0 0.0
    %785 = vmatprep.subr.mxu0 0.0
    %786 = vmatpush1.msra.mxu0 0.0
    %787 = vmatprep.subr.mxu0 0.0
    %788 = vmatpush1.msra.mxu0 0.0
    %789 = vmatprep.subr.mxu0 0.0
    %790 = vmatpush1.msra.mxu0 0.0
    %791 = vmatprep.subr.mxu0 0.0
    %792 = vmatpush1.msra.mxu0 0.0
    %793 = vmatprep.subr.mxu0 0.0
    %794 = vmatpush1.msra.mxu0 0.0
    %795 = vmatprep.subr.mxu0 0.0
    %796 = vmatpush1.msra.mxu0 0.0
    %797 = vmatprep.subr.mxu0 0.0
    %798 = vmatpush1.msra.mxu0 0.0
    %799 = vmatprep.subr.mxu0 0.0
    %800 = vmatpush1.msra.mxu0 0.0
    %801 = vmatprep.subr.mxu0 0.0
    %802 = vmatpush1.msra.mxu0 0.0
    %803 = vmatprep.mubr.f32.mxu0 0.0
    %804 = vmatmul.mubr.f32.gmra.mrb[0].mxu0 %v737
    %v805 = vpop.f32.mrb[0].mxu0
    %v806 = vadd.f32 0.0, %v805
    %v807 = vpop.f32.mrb[0].mxu0
    %808 = vdwg.mxu0
    %811 = vrot.lane.b32.xlu0 %v730, 8
    %v812 = vpop.permute.xlu0 %811
    %813 = vrot.lane.b32.xlu0 %v806, 8
    %v814 = vpop.permute.xlu0 %813
    %vm817 = vcmask 130112
    %818 = vst.msk [vmem:[#allocation2] sm:$0xff] %vm817, %v812
    %819 = vst.msk [vmem:[#allocation2 + $0x8] sm:$0xff] %vm817, %v814
    %820 = vrot.lane.b32.xlu0 %v136, 112
    %v821 = vpop.permute.xlu0 %820
    %822 = vrot.lane.b32.xlu0 %v136, 80
    %v823 = vpop.permute.xlu0 %822
    %v824 = vsel %vm147, %v821, 0
    %v826 = vsel %vm147, %v823, 0
    %828 = vmatprep.subr.mxu0 0.0
    %829 = vmatpush1.xpose.msra.mxu0 %v826
    %830 = vmatprep.subr.mxu0 0.0
    %831 = vmatpush1.xpose.msra.mxu0 0.0
    %832 = vmatprep.subr.mxu0 0.0
    %833 = vmatpush1.xpose.msra.mxu0 0.0
    %834 = vmatprep.subr.mxu0 0.0
    %835 = vmatpush1.xpose.msra.mxu0 0.0
    %836 = vmatprep.subr.mxu0 0.0
    %837 = vmatpush1.xpose.msra.mxu0 0.0
    %838 = vmatprep.subr.mxu0 0.0
    %839 = vmatpush1.xpose.msra.mxu0 0.0
    %840 = vmatprep.subr.mxu0 0.0
    %841 = vmatpush1.xpose.msra.mxu0 0.0
    %842 = vmatprep.subr.mxu0 0.0
    %843 = vmatpush1.xpose.msra.mxu0 0.0
    %844 = vmatprep.subr.mxu0 0.0
    %845 = vmatpush1.xpose.msra.mxu0 0.0
    %846 = vmatprep.subr.mxu0 0.0
    %847 = vmatpush1.xpose.msra.mxu0 0.0
    %848 = vmatprep.subr.mxu0 0.0
    %849 = vmatpush1.xpose.msra.mxu0 0.0
    %850 = vmatprep.subr.mxu0 0.0
    %851 = vmatpush1.xpose.msra.mxu0 0.0
    %852 = vmatprep.subr.mxu0 0.0
    %853 = vmatpush1.xpose.msra.mxu0 0.0
    %854 = vmatprep.subr.mxu0 0.0
    %855 = vmatpush1.xpose.msra.mxu0 0.0
    %856 = vmatprep.subr.mxu0 0.0
    %857 = vmatpush1.xpose.msra.mxu0 0.0
    %858 = vmatprep.subr.mxu0 0.0
    %859 = vmatpush1.xpose.msra.mxu0 0.0
    %860 = vmatprep.subr.mxu0 0.0
    %861 = vmatpush1.xpose.msra.mxu0 0.0
    %862 = vmatprep.subr.mxu0 0.0
    %863 = vmatpush1.xpose.msra.mxu0 0.0
    %864 = vmatprep.subr.mxu0 0.0
    %865 = vmatpush1.xpose.msra.mxu0 0.0
    %866 = vmatprep.subr.mxu0 0.0
    %867 = vmatpush1.xpose.msra.mxu0 0.0
    %868 = vmatprep.subr.mxu0 0.0
    %869 = vmatpush1.xpose.msra.mxu0 0.0
    %870 = vmatprep.subr.mxu0 0.0
    %871 = vmatpush1.xpose.msra.mxu0 0.0
    %872 = vmatprep.subr.mxu0 0.0
    %873 = vmatpush1.xpose.msra.mxu0 0.0
    %874 = vmatprep.subr.mxu0 0.0
    %875 = vmatpush1.xpose.msra.mxu0 0.0
    %876 = vmatprep.subr.mxu0 0.0
    %877 = vmatpush1.xpose.msra.mxu0 0.0
    %878 = vmatprep.subr.mxu0 0.0
    %879 = vmatpush1.xpose.msra.mxu0 0.0
    %880 = vmatprep.subr.mxu0 0.0
    %881 = vmatpush1.xpose.msra.mxu0 0.0
    %882 = vmatprep.subr.mxu0 0.0
    %883 = vmatpush1.xpose.msra.mxu0 0.0
    %884 = vmatprep.subr.mxu0 0.0
    %885 = vmatpush1.xpose.msra.mxu0 0.0
    %886 = vmatprep.subr.mxu0 0.0
    %887 = vmatpush1.xpose.msra.mxu0 0.0
    %888 = vmatprep.subr.mxu0 0.0
    %889 = vmatpush1.xpose.msra.mxu0 0.0
    %890 = vmatprep.subr.mxu0 0.0
    %891 = vmatpush1.xpose.msra.mxu0 0.0
    %892 = vmatprep.mubr.f32.mxu0 0.0
    %893 = vmatmul.mubr.f32.gmra.mrb[0].mxu0 %v824
    %v894 = vpop.f32.mrb[0].mxu0
    %v895 = vadd.f32 0.0, %v894
    %v896 = vpop.f32.mrb[0].mxu0
    %897 = vdwg.mxu0
    %898 = vrot.lane.b32.xlu0 %v141, 112
    %v899 = vpop.permute.xlu0 %898
    %900 = vrot.lane.b32.xlu0 %v141, 80
    %v901 = vpop.permute.xlu0 %900
    %v902 = vsel %vm147, %v899, 0
    %v904 = vsel %vm147, %v901, 0
    %906 = vmatprep.subr.mxu0 0.0
    %907 = vmatpush1.xpose.msra.mxu0 %v904
    %908 = vmatprep.subr.mxu0 0.0
    %909 = vmatpush1.xpose.msra.mxu0 0.0
    %910 = vmatprep.subr.mxu0 0.0
    %911 = vmatpush1.xpose.msra.mxu0 0.0
    %912 = vmatprep.subr.mxu0 0.0
    %913 = vmatpush1.xpose.msra.mxu0 0.0
    %914 = vmatprep.subr.mxu0 0.0
    %915 = vmatpush1.xpose.msra.mxu0 0.0
    %916 = vmatprep.subr.mxu0 0.0
    %917 = vmatpush1.xpose.msra.mxu0 0.0
    %918 = vmatprep.subr.mxu0 0.0
    %919 = vmatpush1.xpose.msra.mxu0 0.0
    %920 = vmatprep.subr.mxu0 0.0
    %921 = vmatpush1.xpose.msra.mxu0 0.0
    %922 = vmatprep.subr.mxu0 0.0
    %923 = vmatpush1.xpose.msra.mxu0 0.0
    %924 = vmatprep.subr.mxu0 0.0
    %925 = vmatpush1.xpose.msra.mxu0 0.0
    %926 = vmatprep.subr.mxu0 0.0
    %927 = vmatpush1.xpose.msra.mxu0 0.0
    %928 = vmatprep.subr.mxu0 0.0
    %929 = vmatpush1.xpose.msra.mxu0 0.0
    %930 = vmatprep.subr.mxu0 0.0
    %931 = vmatpush1.xpose.msra.mxu0 0.0
    %932 = vmatprep.subr.mxu0 0.0
    %933 = vmatpush1.xpose.msra.mxu0 0.0
    %934 = vmatprep.subr.mxu0 0.0
    %935 = vmatpush1.xpose.msra.mxu0 0.0
    %936 = vmatprep.subr.mxu0 0.0
    %937 = vmatpush1.xpose.msra.mxu0 0.0
    %938 = vmatprep.subr.mxu0 0.0
    %939 = vmatpush1.xpose.msra.mxu0 0.0
    %940 = vmatprep.subr.mxu0 0.0
    %941 = vmatpush1.xpose.msra.mxu0 0.0
    %942 = vmatprep.subr.mxu0 0.0
    %943 = vmatpush1.xpose.msra.mxu0 0.0
    %944 = vmatprep.subr.mxu0 0.0
    %945 = vmatpush1.xpose.msra.mxu0 0.0
    %946 = vmatprep.subr.mxu0 0.0
    %947 = vmatpush1.xpose.msra.mxu0 0.0
    %948 = vmatprep.subr.mxu0 0.0
    %949 = vmatpush1.xpose.msra.mxu0 0.0
    %950 = vmatprep.subr.mxu0 0.0
    %951 = vmatpush1.xpose.msra.mxu0 0.0
    %952 = vmatprep.subr.mxu0 0.0
    %953 = vmatpush1.xpose.msra.mxu0 0.0
    %954 = vmatprep.subr.mxu0 0.0
    %955 = vmatpush1.xpose.msra.mxu0 0.0
    %956 = vmatprep.subr.mxu0 0.0
    %957 = vmatpush1.xpose.msra.mxu0 0.0
    %958 = vmatprep.subr.mxu0 0.0
    %959 = vmatpush1.xpose.msra.mxu0 0.0
    %960 = vmatprep.subr.mxu0 0.0
    %961 = vmatpush1.xpose.msra.mxu0 0.0
    %962 = vmatprep.subr.mxu0 0.0
    %963 = vmatpush1.xpose.msra.mxu0 0.0
    %964 = vmatprep.subr.mxu0 0.0
    %965 = vmatpush1.xpose.msra.mxu0 0.0
    %966 = vmatprep.subr.mxu0 0.0
    %967 = vmatpush1.xpose.msra.mxu0 0.0
    %968 = vmatprep.subr.mxu0 0.0
    %969 = vmatpush1.xpose.msra.mxu0 0.0
    %970 = vmatprep.mubr.f32.mxu0 0.0
    %971 = vmatmul.mubr.f32.gmra.mrb[0].mxu0 %v902
    %v972 = vpop.f32.mrb[0].mxu0
    %v973 = vadd.f32 0.0, %v972
    %v974 = vpop.f32.mrb[0].mxu0
    %975 = vdwg.mxu0
    %v976 = vsel %vm147, %v895, -inf
    %977 = vmax.xlane.f32.xlu0 %v976
    %v978 = vpop.xlane.xlu0 %977
    %v979 = vsel %vm147, %v973, -inf
    %980 = vmax.xlane.f32.xlu0 %v979
    %v981 = vpop.xlane.xlu0 %980
    %v982 = vsub.f32 %v895, %v978
    %v983 = vsub.f32 %v973, %v981
    %v984 = vmul.f32 %v982, 1.442695
    %v985 = vpow.pop %v984
    %v986 = vmul.f32 %v983, 1.442695
    %v987 = vpow.pop %v986
    %v988 = vsel %vm147, %v985, 0.0
    %989 = vadd.xlane.f32.xlu0 %v988
    %v990 = vpop.xlane.xlu0 %989
    %v991 = vsel %vm147, %v987, 0.0
    %992 = vadd.xlane.f32.xlu0 %v991
    %v993 = vpop.xlane.xlu0 %992
    %v994 = vrcp.pop %v990
    %v995 = vmul.f32 1.0, %v994
    %v996 = vrcp.pop %v993
    %v997 = vmul.f32 1.0, %v996
    %v998 = vmul.f32 %v985, %v995
    %v999 = vmul.f32 %v987, %v997
    %1000 = vrot.lane.b32.xlu0 %v136, 48
    %v1001 = vpop.permute.xlu0 %1000
    %v1004 = vsel %vm147, %v998, 0
    %1006 = vmatprep.subr.mxu0 0.0
    %1007 = vmatpush1.msra.mxu0 %v1001
    %1008 = vmatprep.subr.mxu0 0.0
    %1009 = vmatpush1.msra.mxu0 0.0
    %1010 = vmatprep.subr.mxu0 0.0
    %1011 = vmatpush1.msra.mxu0 0.0
    %1012 = vmatprep.subr.mxu0 0.0
    %1013 = vmatpush1.msra.mxu0 0.0
    %1014 = vmatprep.subr.mxu0 0.0
    %1015 = vmatpush1.msra.mxu0 0.0
    %1016 = vmatprep.subr.mxu0 0.0
    %1017 = vmatpush1.msra.mxu0 0.0
    %1018 = vmatprep.subr.mxu0 0.0
    %1019 = vmatpush1.msra.mxu0 0.0
    %1020 = vmatprep.subr.mxu0 0.0
    %1021 = vmatpush1.msra.mxu0 0.0
    %1022 = vmatprep.subr.mxu0 0.0
    %1023 = vmatpush1.msra.mxu0 0.0
    %1024 = vmatprep.subr.mxu0 0.0
    %1025 = vmatpush1.msra.mxu0 0.0
    %1026 = vmatprep.subr.mxu0 0.0
    %1027 = vmatpush1.msra.mxu0 0.0
    %1028 = vmatprep.subr.mxu0 0.0
    %1029 = vmatpush1.msra.mxu0 0.0
    %1030 = vmatprep.subr.mxu0 0.0
    %1031 = vmatpush1.msra.mxu0 0.0
    %1032 = vmatprep.subr.mxu0 0.0
    %1033 = vmatpush1.msra.mxu0 0.0
    %1034 = vmatprep.subr.mxu0 0.0
    %1035 = vmatpush1.msra.mxu0 0.0
    %1036 = vmatprep.subr.mxu0 0.0
    %1037 = vmatpush1.msra.mxu0 0.0
    %1038 = vmatprep.subr.mxu0 0.0
    %1039 = vmatpush1.msra.mxu0 0.0
    %1040 = vmatprep.subr.mxu0 0.0
    %1041 = vmatpush1.msra.mxu0 0.0
    %1042 = vmatprep.subr.mxu0 0.0
    %1043 = vmatpush1.msra.mxu0 0.0
    %1044 = vmatprep.subr.mxu0 0.0
    %1045 = vmatpush1.msra.mxu0 0.0
    %1046 = vmatprep.subr.mxu0 0.0
    %1047 = vmatpush1.msra.mxu0 0.0
    %1048 = vmatprep.subr.mxu0 0.0
    %1049 = vmatpush1.msra.mxu0 0.0
    %1050 = vmatprep.subr.mxu0 0.0
    %1051 = vmatpush1.msra.mxu0 0.0
    %1052 = vmatprep.subr.mxu0 0.0
    %1053 = vmatpush1.msra.mxu0 0.0
    %1054 = vmatprep.subr.mxu0 0.0
    %1055 = vmatpush1.msra.mxu0 0.0
    %1056 = vmatprep.subr.mxu0 0.0
    %1057 = vmatpush1.msra.mxu0 0.0
    %1058 = vmatprep.subr.mxu0 0.0
    %1059 = vmatpush1.msra.mxu0 0.0
    %1060 = vmatprep.subr.mxu0 0.0
    %1061 = vmatpush1.msra.mxu0 0.0
    %1062 = vmatprep.subr.mxu0 0.0
    %1063 = vmatpush1.msra.mxu0 0.0
    %1064 = vmatprep.subr.mxu0 0.0
    %1065 = vmatpush1.msra.mxu0 0.0
    %1066 = vmatprep.subr.mxu0 0.0
    %1067 = vmatpush1.msra.mxu0 0.0
    %1068 = vmatprep.subr.mxu0 0.0
    %1069 = vmatpush1.msra.mxu0 0.0
    %1070 = vmatprep.mubr.f32.mxu0 0.0
    %1071 = vmatmul.mubr.f32.gmra.mrb[0].mxu0 %v1004
    %v1072 = vpop.f32.mrb[0].mxu0
    %v1073 = vadd.f32 0.0, %v1072
    %v1074 = vpop.f32.mrb[0].mxu0
    %1075 = vdwg.mxu0
    %1076 = vrot.lane.b32.xlu0 %v141, 48
    %v1077 = vpop.permute.xlu0 %1076
    %v1080 = vsel %vm147, %v999, 0
    %1082 = vmatprep.subr.mxu0 0.0
    %1083 = vmatpush1.msra.mxu0 %v1077
    %1084 = vmatprep.subr.mxu0 0.0
    %1085 = vmatpush1.msra.mxu0 0.0
    %1086 = vmatprep.subr.mxu0 0.0
    %1087 = vmatpush1.msra.mxu0 0.0
    %1088 = vmatprep.subr.mxu0 0.0
    %1089 = vmatpush1.msra.mxu0 0.0
    %1090 = vmatprep.subr.mxu0 0.0
    %1091 = vmatpush1.msra.mxu0 0.0
    %1092 = vmatprep.subr.mxu0 0.0
    %1093 = vmatpush1.msra.mxu0 0.0
    %1094 = vmatprep.subr.mxu0 0.0
    %1095 = vmatpush1.msra.mxu0 0.0
    %1096 = vmatprep.subr.mxu0 0.0
    %1097 = vmatpush1.msra.mxu0 0.0
    %1098 = vmatprep.subr.mxu0 0.0
    %1099 = vmatpush1.msra.mxu0 0.0
    %1100 = vmatprep.subr.mxu0 0.0
    %1101 = vmatpush1.msra.mxu0 0.0
    %1102 = vmatprep.subr.mxu0 0.0
    %1103 = vmatpush1.msra.mxu0 0.0
    %1104 = vmatprep.subr.mxu0 0.0
    %1105 = vmatpush1.msra.mxu0 0.0
    %1106 = vmatprep.subr.mxu0 0.0
    %1107 = vmatpush1.msra.mxu0 0.0
    %1108 = vmatprep.subr.mxu0 0.0
    %1109 = vmatpush1.msra.mxu0 0.0
    %1110 = vmatprep.subr.mxu0 0.0
    %1111 = vmatpush1.msra.mxu0 0.0
    %1112 = vmatprep.subr.mxu0 0.0
    %1113 = vmatpush1.msra.mxu0 0.0
    %1114 = vmatprep.subr.mxu0 0.0
    %1115 = vmatpush1.msra.mxu0 0.0
    %1116 = vmatprep.subr.mxu0 0.0
    %1117 = vmatpush1.msra.mxu0 0.0
    %1118 = vmatprep.subr.mxu0 0.0
    %1119 = vmatpush1.msra.mxu0 0.0
    %1120 = vmatprep.subr.mxu0 0.0
    %1121 = vmatpush1.msra.mxu0 0.0
    %1122 = vmatprep.subr.mxu0 0.0
    %1123 = vmatpush1.msra.mxu0 0.0
    %1124 = vmatprep.subr.mxu0 0.0
    %1125 = vmatpush1.msra.mxu0 0.0
    %1126 = vmatprep.subr.mxu0 0.0
    %1127 = vmatpush1.msra.mxu0 0.0
    %1128 = vmatprep.subr.mxu0 0.0
    %1129 = vmatpush1.msra.mxu0 0.0
    %1130 = vmatprep.subr.mxu0 0.0
    %1131 = vmatpush1.msra.mxu0 0.0
    %1132 = vmatprep.subr.mxu0 0.0
    %1133 = vmatpush1.msra.mxu0 0.0
    %1134 = vmatprep.subr.mxu0 0.0
    %1135 = vmatpush1.msra.mxu0 0.0
    %1136 = vmatprep.subr.mxu0 0.0
    %1137 = vmatpush1.msra.mxu0 0.0
    %1138 = vmatprep.subr.mxu0 0.0
    %1139 = vmatpush1.msra.mxu0 0.0
    %1140 = vmatprep.subr.mxu0 0.0
    %1141 = vmatpush1.msra.mxu0 0.0
    %1142 = vmatprep.subr.mxu0 0.0
    %1143 = vmatpush1.msra.mxu0 0.0
    %1144 = vmatprep.subr.mxu0 0.0
    %1145 = vmatpush1.msra.mxu0 0.0
    %1146 = vmatprep.mubr.f32.mxu0 0.0
    %1147 = vmatmul.mubr.f32.gmra.mrb[0].mxu0 %v1080
    %v1148 = vpop.f32.mrb[0].mxu0
    %v1149 = vadd.f32 0.0, %v1148
    %v1150 = vpop.f32.mrb[0].mxu0
    %1151 = vdwg.mxu0
    %1154 = vrot.lane.b32.xlu0 %v1073, 16
    %v1155 = vpop.permute.xlu0 %1154
    %1156 = vrot.lane.b32.xlu0 %v1149, 16
    %v1157 = vpop.permute.xlu0 %1156
    %vm1160 = vcmask 195712
    %1161 = vst.msk [vmem:[#allocation2] sm:$0xff] %vm1160, %v1155
    %1162 = vst.msk [vmem:[#allocation2 + $0x8] sm:$0xff] %vm1160, %v1157
    %1163 = vrot.lane.b32.xlu0 %v136, 104
    %v1164 = vpop.permute.xlu0 %1163
    %1165 = vrot.lane.b32.xlu0 %v136, 72
    %v1166 = vpop.permute.xlu0 %1165
    %v1167 = vsel %vm147, %v1164, 0
    %v1169 = vsel %vm147, %v1166, 0
    %1171 = vmatprep.subr.mxu0 0.0
    %1172 = vmatpush1.xpose.msra.mxu0 %v1169
    %1173 = vmatprep.subr.mxu0 0.0
    %1174 = vmatpush1.xpose.msra.mxu0 0.0
    %1175 = vmatprep.subr.mxu0 0.0
    %1176 = vmatpush1.xpose.msra.mxu0 0.0
    %1177 = vmatprep.subr.mxu0 0.0
    %1178 = vmatpush1.xpose.msra.mxu0 0.0
    %1179 = vmatprep.subr.mxu0 0.0
    %1180 = vmatpush1.xpose.msra.mxu0 0.0
    %1181 = vmatprep.subr.mxu0 0.0
    %1182 = vmatpush1.xpose.msra.mxu0 0.0
    %1183 = vmatprep.subr.mxu0 0.0
    %1184 = vmatpush1.xpose.msra.mxu0 0.0
    %1185 = vmatprep.subr.mxu0 0.0
    %1186 = vmatpush1.xpose.msra.mxu0 0.0
    %1187 = vmatprep.subr.mxu0 0.0
    %1188 = vmatpush1.xpose.msra.mxu0 0.0
    %1189 = vmatprep.subr.mxu0 0.0
    %1190 = vmatpush1.xpose.msra.mxu0 0.0
    %1191 = vmatprep.subr.mxu0 0.0
    %1192 = vmatpush1.xpose.msra.mxu0 0.0
    %1193 = vmatprep.subr.mxu0 0.0
    %1194 = vmatpush1.xpose.msra.mxu0 0.0
    %1195 = vmatprep.subr.mxu0 0.0
    %1196 = vmatpush1.xpose.msra.mxu0 0.0
    %1197 = vmatprep.subr.mxu0 0.0
    %1198 = vmatpush1.xpose.msra.mxu0 0.0
    %1199 = vmatprep.subr.mxu0 0.0
    %1200 = vmatpush1.xpose.msra.mxu0 0.0
    %1201 = vmatprep.subr.mxu0 0.0
    %1202 = vmatpush1.xpose.msra.mxu0 0.0
    %1203 = vmatprep.subr.mxu0 0.0
    %1204 = vmatpush1.xpose.msra.mxu0 0.0
    %1205 = vmatprep.subr.mxu0 0.0
    %1206 = vmatpush1.xpose.msra.mxu0 0.0
    %1207 = vmatprep.subr.mxu0 0.0
    %1208 = vmatpush1.xpose.msra.mxu0 0.0
    %1209 = vmatprep.subr.mxu0 0.0
    %1210 = vmatpush1.xpose.msra.mxu0 0.0
    %1211 = vmatprep.subr.mxu0 0.0
    %1212 = vmatpush1.xpose.msra.mxu0 0.0
    %1213 = vmatprep.subr.mxu0 0.0
    %1214 = vmatpush1.xpose.msra.mxu0 0.0
    %1215 = vmatprep.subr.mxu0 0.0
    %1216 = vmatpush1.xpose.msra.mxu0 0.0
    %1217 = vmatprep.subr.mxu0 0.0
    %1218 = vmatpush1.xpose.msra.mxu0 0.0
    %1219 = vmatprep.subr.mxu0 0.0
    %1220 = vmatpush1.xpose.msra.mxu0 0.0
    %1221 = vmatprep.subr.mxu0 0.0
    %1222 = vmatpush1.xpose.msra.mxu0 0.0
    %1223 = vmatprep.subr.mxu0 0.0
    %1224 = vmatpush1.xpose.msra.mxu0 0.0
    %1225 = vmatprep.subr.mxu0 0.0
    %1226 = vmatpush1.xpose.msra.mxu0 0.0
    %1227 = vmatprep.subr.mxu0 0.0
    %1228 = vmatpush1.xpose.msra.mxu0 0.0
    %1229 = vmatprep.subr.mxu0 0.0
    %1230 = vmatpush1.xpose.msra.mxu0 0.0
    %1231 = vmatprep.subr.mxu0 0.0
    %1232 = vmatpush1.xpose.msra.mxu0 0.0
    %1233 = vmatprep.subr.mxu0 0.0
    %1234 = vmatpush1.xpose.msra.mxu0 0.0
    %1235 = vmatprep.mubr.f32.mxu0 0.0
    %1236 = vmatmul.mubr.f32.gmra.mrb[0].mxu0 %v1167
    %v1237 = vpop.f32.mrb[0].mxu0
    %v1238 = vadd.f32 0.0, %v1237
    %v1239 = vpop.f32.mrb[0].mxu0
    %1240 = vdwg.mxu0
    %1241 = vrot.lane.b32.xlu0 %v141, 104
    %v1242 = vpop.permute.xlu0 %1241
    %1243 = vrot.lane.b32.xlu0 %v141, 72
    %v1244 = vpop.permute.xlu0 %1243
    %v1245 = vsel %vm147, %v1242, 0
    %v1247 = vsel %vm147, %v1244, 0
    %1249 = vmatprep.subr.mxu0 0.0
    %1250 = vmatpush1.xpose.msra.mxu0 %v1247
    %1251 = vmatprep.subr.mxu0 0.0
    %1252 = vmatpush1.xpose.msra.mxu0 0.0
    %1253 = vmatprep.subr.mxu0 0.0
    %1254 = vmatpush1.xpose.msra.mxu0 0.0
    %1255 = vmatprep.subr.mxu0 0.0
    %1256 = vmatpush1.xpose.msra.mxu0 0.0
    %1257 = vmatprep.subr.mxu0 0.0
    %1258 = vmatpush1.xpose.msra.mxu0 0.0
    %1259 = vmatprep.subr.mxu0 0.0
    %1260 = vmatpush1.xpose.msra.mxu0 0.0
    %1261 = vmatprep.subr.mxu0 0.0
    %1262 = vmatpush1.xpose.msra.mxu0 0.0
    %1263 = vmatprep.subr.mxu0 0.0
    %1264 = vmatpush1.xpose.msra.mxu0 0.0
    %1265 = vmatprep.subr.mxu0 0.0
    %1266 = vmatpush1.xpose.msra.mxu0 0.0
    %1267 = vmatprep.subr.mxu0 0.0
    %1268 = vmatpush1.xpose.msra.mxu0 0.0
    %1269 = vmatprep.subr.mxu0 0.0
    %1270 = vmatpush1.xpose.msra.mxu0 0.0
    %1271 = vmatprep.subr.mxu0 0.0
    %1272 = vmatpush1.xpose.msra.mxu0 0.0
    %1273 = vmatprep.subr.mxu0 0.0
    %1274 = vmatpush1.xpose.msra.mxu0 0.0
    %1275 = vmatprep.subr.mxu0 0.0
    %1276 = vmatpush1.xpose.msra.mxu0 0.0
    %1277 = vmatprep.subr.mxu0 0.0
    %1278 = vmatpush1.xpose.msra.mxu0 0.0
    %1279 = vmatprep.subr.mxu0 0.0
    %1280 = vmatpush1.xpose.msra.mxu0 0.0
    %1281 = vmatprep.subr.mxu0 0.0
    %1282 = vmatpush1.xpose.msra.mxu0 0.0
    %1283 = vmatprep.subr.mxu0 0.0
    %1284 = vmatpush1.xpose.msra.mxu0 0.0
    %1285 = vmatprep.subr.mxu0 0.0
    %1286 = vmatpush1.xpose.msra.mxu0 0.0
    %1287 = vmatprep.subr.mxu0 0.0
    %1288 = vmatpush1.xpose.msra.mxu0 0.0
    %1289 = vmatprep.subr.mxu0 0.0
    %1290 = vmatpush1.xpose.msra.mxu0 0.0
    %1291 = vmatprep.subr.mxu0 0.0
    %1292 = vmatpush1.xpose.msra.mxu0 0.0
    %1293 = vmatprep.subr.mxu0 0.0
    %1294 = vmatpush1.xpose.msra.mxu0 0.0
    %1295 = vmatprep.subr.mxu0 0.0
    %1296 = vmatpush1.xpose.msra.mxu0 0.0
    %1297 = vmatprep.subr.mxu0 0.0
    %1298 = vmatpush1.xpose.msra.mxu0 0.0
    %1299 = vmatprep.subr.mxu0 0.0
    %1300 = vmatpush1.xpose.msra.mxu0 0.0
    %1301 = vmatprep.subr.mxu0 0.0
    %1302 = vmatpush1.xpose.msra.mxu0 0.0
    %1303 = vmatprep.subr.mxu0 0.0
    %1304 = vmatpush1.xpose.msra.mxu0 0.0
    %1305 = vmatprep.subr.mxu0 0.0
    %1306 = vmatpush1.xpose.msra.mxu0 0.0
    %1307 = vmatprep.subr.mxu0 0.0
    %1308 = vmatpush1.xpose.msra.mxu0 0.0
    %1309 = vmatprep.subr.mxu0 0.0
    %1310 = vmatpush1.xpose.msra.mxu0 0.0
    %1311 = vmatprep.subr.mxu0 0.0
    %1312 = vmatpush1.xpose.msra.mxu0 0.0
    %1313 = vmatprep.mubr.f32.mxu0 0.0
    %1314 = vmatmul.mubr.f32.gmra.mrb[0].mxu0 %v1245
    %v1315 = vpop.f32.mrb[0].mxu0
    %v1316 = vadd.f32 0.0, %v1315
    %v1317 = vpop.f32.mrb[0].mxu0
    %1318 = vdwg.mxu0
    %v1319 = vsel %vm147, %v1238, -inf
    %1320 = vmax.xlane.f32.xlu0 %v1319
    %v1321 = vpop.xlane.xlu0 %1320
    %v1322 = vsel %vm147, %v1316, -inf
    %1323 = vmax.xlane.f32.xlu0 %v1322
    %v1324 = vpop.xlane.xlu0 %1323
    %v1325 = vsub.f32 %v1238, %v1321
    %v1326 = vsub.f32 %v1316, %v1324
    %v1327 = vmul.f32 %v1325, 1.442695
    %v1328 = vpow.pop %v1327
    %v1329 = vmul.f32 %v1326, 1.442695
    %v1330 = vpow.pop %v1329
    %v1331 = vsel %vm147, %v1328, 0.0
    %1332 = vadd.xlane.f32.xlu0 %v1331
    %v1333 = vpop.xlane.xlu0 %1332
    %v1334 = vsel %vm147, %v1330, 0.0
    %1335 = vadd.xlane.f32.xlu0 %v1334
    %v1336 = vpop.xlane.xlu0 %1335
    %v1337 = vrcp.pop %v1333
    %v1338 = vmul.f32 1.0, %v1337
    %v1339 = vrcp.pop %v1336
    %v1340 = vmul.f32 1.0, %v1339
    %v1341 = vmul.f32 %v1328, %v1338
    %v1342 = vmul.f32 %v1330, %v1340
    %1343 = vrot.lane.b32.xlu0 %v136, 40
    %v1344 = vpop.permute.xlu0 %1343
    %v1347 = vsel %vm147, %v1341, 0
    %1349 = vmatprep.subr.mxu0 0.0
    %1350 = vmatpush1.msra.mxu0 %v1344
    %1351 = vmatprep.subr.mxu0 0.0
    %1352 = vmatpush1.msra.mxu0 0.0
    %1353 = vmatprep.subr.mxu0 0.0
    %1354 = vmatpush1.msra.mxu0 0.0
    %1355 = vmatprep.subr.mxu0 0.0
    %1356 = vmatpush1.msra.mxu0 0.0
    %1357 = vmatprep.subr.mxu0 0.0
    %1358 = vmatpush1.msra.mxu0 0.0
    %1359 = vmatprep.subr.mxu0 0.0
    %1360 = vmatpush1.msra.mxu0 0.0
    %1361 = vmatprep.subr.mxu0 0.0
    %1362 = vmatpush1.msra.mxu0 0.0
    %1363 = vmatprep.subr.mxu0 0.0
    %1364 = vmatpush1.msra.mxu0 0.0
    %1365 = vmatprep.subr.mxu0 0.0
    %1366 = vmatpush1.msra.mxu0 0.0
    %1367 = vmatprep.subr.mxu0 0.0
    %1368 = vmatpush1.msra.mxu0 0.0
    %1369 = vmatprep.subr.mxu0 0.0
    %1370 = vmatpush1.msra.mxu0 0.0
    %1371 = vmatprep.subr.mxu0 0.0
    %1372 = vmatpush1.msra.mxu0 0.0
    %1373 = vmatprep.subr.mxu0 0.0
    %1374 = vmatpush1.msra.mxu0 0.0
    %1375 = vmatprep.subr.mxu0 0.0
    %1376 = vmatpush1.msra.mxu0 0.0
    %1377 = vmatprep.subr.mxu0 0.0
    %1378 = vmatpush1.msra.mxu0 0.0
    %1379 = vmatprep.subr.mxu0 0.0
    %1380 = vmatpush1.msra.mxu0 0.0
    %1381 = vmatprep.subr.mxu0 0.0
    %1382 = vmatpush1.msra.mxu0 0.0
    %1383 = vmatprep.subr.mxu0 0.0
    %1384 = vmatpush1.msra.mxu0 0.0
    %1385 = vmatprep.subr.mxu0 0.0
    %1386 = vmatpush1.msra.mxu0 0.0
    %1387 = vmatprep.subr.mxu0 0.0
    %1388 = vmatpush1.msra.mxu0 0.0
    %1389 = vmatprep.subr.mxu0 0.0
    %1390 = vmatpush1.msra.mxu0 0.0
    %1391 = vmatprep.subr.mxu0 0.0
    %1392 = vmatpush1.msra.mxu0 0.0
    %1393 = vmatprep.subr.mxu0 0.0
    %1394 = vmatpush1.msra.mxu0 0.0
    %1395 = vmatprep.subr.mxu0 0.0
    %1396 = vmatpush1.msra.mxu0 0.0
    %1397 = vmatprep.subr.mxu0 0.0
    %1398 = vmatpush1.msra.mxu0 0.0
    %1399 = vmatprep.subr.mxu0 0.0
    %1400 = vmatpush1.msra.mxu0 0.0
    %1401 = vmatprep.subr.mxu0 0.0
    %1402 = vmatpush1.msra.mxu0 0.0
    %1403 = vmatprep.subr.mxu0 0.0
    %1404 = vmatpush1.msra.mxu0 0.0
    %1405 = vmatprep.subr.mxu0 0.0
    %1406 = vmatpush1.msra.mxu0 0.0
    %1407 = vmatprep.subr.mxu0 0.0
    %1408 = vmatpush1.msra.mxu0 0.0
    %1409 = vmatprep.subr.mxu0 0.0
    %1410 = vmatpush1.msra.mxu0 0.0
    %1411 = vmatprep.subr.mxu0 0.0
    %1412 = vmatpush1.msra.mxu0 0.0
    %1413 = vmatprep.mubr.f32.mxu0 0.0
    %1414 = vmatmul.mubr.f32.gmra.mrb[0].mxu0 %v1347
    %v1415 = vpop.f32.mrb[0].mxu0
    %v1416 = vadd.f32 0.0, %v1415
    %v1417 = vpop.f32.mrb[0].mxu0
    %1418 = vdwg.mxu0
    %1419 = vrot.lane.b32.xlu0 %v141, 40
    %v1420 = vpop.permute.xlu0 %1419
    %v1423 = vsel %vm147, %v1342, 0
    %1425 = vmatprep.subr.mxu0 0.0
    %1426 = vmatpush1.msra.mxu0 %v1420
    %1427 = vmatprep.subr.mxu0 0.0
    %1428 = vmatpush1.msra.mxu0 0.0
    %1429 = vmatprep.subr.mxu0 0.0
    %1430 = vmatpush1.msra.mxu0 0.0
    %1431 = vmatprep.subr.mxu0 0.0
    %1432 = vmatpush1.msra.mxu0 0.0
    %1433 = vmatprep.subr.mxu0 0.0
    %1434 = vmatpush1.msra.mxu0 0.0
    %1435 = vmatprep.subr.mxu0 0.0
    %1436 = vmatpush1.msra.mxu0 0.0
    %1437 = vmatprep.subr.mxu0 0.0
    %1438 = vmatpush1.msra.mxu0 0.0
    %1439 = vmatprep.subr.mxu0 0.0
    %1440 = vmatpush1.msra.mxu0 0.0
    %1441 = vmatprep.subr.mxu0 0.0
    %1442 = vmatpush1.msra.mxu0 0.0
    %1443 = vmatprep.subr.mxu0 0.0
    %1444 = vmatpush1.msra.mxu0 0.0
    %1445 = vmatprep.subr.mxu0 0.0
    %1446 = vmatpush1.msra.mxu0 0.0
    %1447 = vmatprep.subr.mxu0 0.0
    %1448 = vmatpush1.msra.mxu0 0.0
    %1449 = vmatprep.subr.mxu0 0.0
    %1450 = vmatpush1.msra.mxu0 0.0
    %1451 = vmatprep.subr.mxu0 0.0
    %1452 = vmatpush1.msra.mxu0 0.0
    %1453 = vmatprep.subr.mxu0 0.0
    %1454 = vmatpush1.msra.mxu0 0.0
    %1455 = vmatprep.subr.mxu0 0.0
    %1456 = vmatpush1.msra.mxu0 0.0
    %1457 = vmatprep.subr.mxu0 0.0
    %1458 = vmatpush1.msra.mxu0 0.0
    %1459 = vmatprep.subr.mxu0 0.0
    %1460 = vmatpush1.msra.mxu0 0.0
    %1461 = vmatprep.subr.mxu0 0.0
    %1462 = vmatpush1.msra.mxu0 0.0
    %1463 = vmatprep.subr.mxu0 0.0
    %1464 = vmatpush1.msra.mxu0 0.0
    %1465 = vmatprep.subr.mxu0 0.0
    %1466 = vmatpush1.msra.mxu0 0.0
    %1467 = vmatprep.subr.mxu0 0.0
    %1468 = vmatpush1.msra.mxu0 0.0
    %1469 = vmatprep.subr.mxu0 0.0
    %1470 = vmatpush1.msra.mxu0 0.0
    %1471 = vmatprep.subr.mxu0 0.0
    %1472 = vmatpush1.msra.mxu0 0.0
    %1473 = vmatprep.subr.mxu0 0.0
    %1474 = vmatpush1.msra.mxu0 0.0
    %1475 = vmatprep.subr.mxu0 0.0
    %1476 = vmatpush1.msra.mxu0 0.0
    %1477 = vmatprep.subr.mxu0 0.0
    %1478 = vmatpush1.msra.mxu0 0.0
    %1479 = vmatprep.subr.mxu0 0.0
    %1480 = vmatpush1.msra.mxu0 0.0
    %1481 = vmatprep.subr.mxu0 0.0
    %1482 = vmatpush1.msra.mxu0 0.0
    %1483 = vmatprep.subr.mxu0 0.0
    %1484 = vmatpush1.msra.mxu0 0.0
    %1485 = vmatprep.subr.mxu0 0.0
    %1486 = vmatpush1.msra.mxu0 0.0
    %1487 = vmatprep.subr.mxu0 0.0
    %1488 = vmatpush1.msra.mxu0 0.0
    %1489 = vmatprep.mubr.f32.mxu0 0.0
    %1490 = vmatmul.mubr.f32.gmra.mrb[0].mxu0 %v1423
    %v1491 = vpop.f32.mrb[0].mxu0
    %v1492 = vadd.f32 0.0, %v1491
    %v1493 = vpop.f32.mrb[0].mxu0
    %1494 = vdwg.mxu0
    %1497 = vrot.lane.b32.xlu0 %v1416, 24
    %v1498 = vpop.permute.xlu0 %1497
    %1499 = vrot.lane.b32.xlu0 %v1492, 24
    %v1500 = vpop.permute.xlu0 %1499
    %vm1503 = vcmask 261312
    %1504 = vst.msk [vmem:[#allocation2] sm:$0xff] %vm1503, %v1498
    %1505 = vst.msk [vmem:[#allocation2 + $0x8] sm:$0xff] %vm1503, %v1500
    %v1506 = vld [vmem:[#allocation2] sm:$0xff]
    %v1507 = vld [vmem:[#allocation2 + $0x8] sm:$0xff]
    %v1508 = vld [vmem:[#allocation8] sm:$0xff]
    %v1509 = vld [vmem:[#allocation8 + $0x8] sm:$0xff]
    %v1510 = vld [vmem:[#allocation8 + $0x10] sm:$0xff]
    %v1511 = vld [vmem:[#allocation8 + $0x18] sm:$0xff]
    %v1513 = vsel %vm62, %v1506, 0
    %v1516 = vsel %vm62, %v1507, 0
    %1518 = vmatprep.subr.mxu0 0.0
    %1519 = vmatpush1.msra.mxu0 %v1508
    %1520 = vmatprep.subr.mxu0 0.0
    %1521 = vmatpush1.msra.mxu0 %v1509
    %1522 = vmatprep.subr.mxu0 0.0
    %1523 = vmatpush1.msra.mxu0 %v1510
    %1524 = vmatprep.subr.mxu0 0.0
    %1525 = vmatpush1.msra.mxu0 %v1511
    %1526 = vmatprep.subr.mxu0 0.0
    %1527 = vmatpush1.msra.mxu0 0.0
    %1528 = vmatprep.subr.mxu0 0.0
    %1529 = vmatpush1.msra.mxu0 0.0
    %1530 = vmatprep.subr.mxu0 0.0
    %1531 = vmatpush1.msra.mxu0 0.0
    %1532 = vmatprep.subr.mxu0 0.0
    %1533 = vmatpush1.msra.mxu0 0.0
    %1534 = vmatprep.subr.mxu0 0.0
    %1535 = vmatpush1.msra.mxu0 0.0
    %1536 = vmatprep.subr.mxu0 0.0
    %1537 = vmatpush1.msra.mxu0 0.0
    %1538 = vmatprep.subr.mxu0 0.0
    %1539 = vmatpush1.msra.mxu0 0.0
    %1540 = vmatprep.subr.mxu0 0.0
    %1541 = vmatpush1.msra.mxu0 0.0
    %1542 = vmatprep.subr.mxu0 0.0
    %1543 = vmatpush1.msra.mxu0 0.0
    %1544 = vmatprep.subr.mxu0 0.0
    %1545 = vmatpush1.msra.mxu0 0.0
    %1546 = vmatprep.subr.mxu0 0.0
    %1547 = vmatpush1.msra.mxu0 0.0
    %1548 = vmatprep.subr.mxu0 0.0
    %1549 = vmatpush1.msra.mxu0 0.0
    %1550 = vmatprep.subr.mxu0 0.0
    %1551 = vmatpush1.msra.mxu0 0.0
    %1552 = vmatprep.subr.mxu0 0.0
    %1553 = vmatpush1.msra.mxu0 0.0
    %1554 = vmatprep.subr.mxu0 0.0
    %1555 = vmatpush1.msra.mxu0 0.0
    %1556 = vmatprep.subr.mxu0 0.0
    %1557 = vmatpush1.msra.mxu0 0.0
    %1558 = vmatprep.subr.mxu0 0.0
    %1559 = vmatpush1.msra.mxu0 0.0
    %1560 = vmatprep.subr.mxu0 0.0
    %1561 = vmatpush1.msra.mxu0 0.0
    %1562 = vmatprep.subr.mxu0 0.0
    %1563 = vmatpush1.msra.mxu0 0.0
    %1564 = vmatprep.subr.mxu0 0.0
    %1565 = vmatpush1.msra.mxu0 0.0
    %1566 = vmatprep.subr.mxu0 0.0
    %1567 = vmatpush1.msra.mxu0 0.0
    %1568 = vmatprep.subr.mxu0 0.0
    %1569 = vmatpush1.msra.mxu0 0.0
    %1570 = vmatprep.subr.mxu0 0.0
    %1571 = vmatpush1.msra.mxu0 0.0
    %1572 = vmatprep.subr.mxu0 0.0
    %1573 = vmatpush1.msra.mxu0 0.0
    %1574 = vmatprep.subr.mxu0 0.0
    %1575 = vmatpush1.msra.mxu0 0.0
    %1576 = vmatprep.subr.mxu0 0.0
    %1577 = vmatpush1.msra.mxu0 0.0
    %1578 = vmatprep.subr.mxu0 0.0
    %1579 = vmatpush1.msra.mxu0 0.0
    %1580 = vmatprep.subr.mxu0 0.0
    %1581 = vmatpush1.msra.mxu0 0.0
    %1582 = vmatprep.mubr.f32.mxu0 0.0
    %1583 = vmatmul.mubr.f32.gmra.mrb[0].mxu0 %v1513
    %v1584 = vpop.f32.mrb[0].mxu0
    %v1585 = vadd.f32 0.0, %v1584
    %v1586 = vpop.f32.mrb[0].mxu0
    %1587 = vmatprep.mubr.f32.mxu0 0.0
    %1588 = vmatmul.mubr.f32.gmra.mrb[0].mxu0 %v1516
    %v1589 = vpop.f32.mrb[0].mxu0
    %v1590 = vadd.f32 0.0, %v1589
    %v1591 = vpop.f32.mrb[0].mxu0
    %1592 = vdwg.mxu0
    %1593 = vst.msk [vmem:[#allocation9] sm:$0xff] %vm62, %v1585
    %1594 = vst.msk [vmem:[#allocation9 + $0x8] sm:$0xff] %vm62, %v1590
    // Predicated region
    $region26: #{tpu_custom_call.1} parent=1 // pred_check
      _
    $region27: #{tpu_custom_call.1} parent=1 // pred_check_branch
      %1596 = sbr.rel (0) target = $region29
    $region28: #{tpu_custom_call.1} parent=1 // pred_region
      %s1598 = ssub.s32 256, 256
      %1599 = vsyncadd [#allocation5], %s1598
      %s1600 = sshll.u32 [#allocation9], 4
      %s1601 = int_to_ptr.vmem [resolvable:$true] %s1600
      %1606 = dma.vmem_to_hbm [thread:$0]  %s1601, 256, %s3, [#allocation5], 128, 128, 8
    $region29: #{tpu_custom_call.1} parent=1 // pred_fallthru
      _
    // Predicated region
    $region30: #{tpu_custom_call.1} parent=1 // pred_check
      _
    $region31: #{tpu_custom_call.1} parent=1 // pred_check_branch
      %1608 = sbr.rel (0) target = $region33
    $region32: #{tpu_custom_call.1} parent=1 // pred_region
      %1609 = dma.done [#allocation5], 256
    $region33: #{tpu_custom_call.1} parent=1 // pred_fallthru
      _
    %1610 = vsyncpa [#allocation4], 1
    %1611 = vsyncpa [#allocation7], 1
    %1612 = vsyncpa [#allocation5], 1

</llo_original>
